<compile_context>
chip_gen: v7x
topology: tpu7x:2x2x1
jax: 0.10.0
libtpu: 0.0.40
codegen_flags: <defaults>
</compile_context>

<pallas_src>
import jax
import jax.numpy as jnp
from jax.experimental import pallas as pl
from jax.experimental.pallas import tpu as pltpu

_LANE = 128      # vreg lane width: feature dims padded to a multiple of this
_EPS = 1e-5      # nn.LayerNorm default eps


def _round_up(x, m):
    return ((x + m - 1) // m) * m


def _gelu(x, approx):
    if approx:
        # tanh-approx GELU: transcendental runs on the EUP (separate bundle slot).
        # NOTE: deviates ~1e-3 abs from nn.GELU()'s exact erf; use approx=False
        # if bit-level parity with the PyTorch module is required.
        return jax.nn.gelu(x, approximate=True)
    return 0.5 * x * (1.0 + jax.lax.erf(x * 0.7071067811865476))


def _layernorm(x, gamma, beta, d_valid):
    """LayerNorm over the last axis of x (tm, d_pad), f32.

    Padding lanes of x are zero by construction, so sum(x) and sum(x*x) over
    the padded width already equal the sums over the `d_valid` real features:
    no per-call iota/compare/where mask (pure VALU work removed).
    var = E[x^2] - mu^2, clamped at 0; gamma/beta are zero-padded so padding
    lanes of the output stay exactly 0.
    """
    inv_d = 1.0 / float(d_valid)
    mu = jnp.sum(x, axis=-1, keepdims=True) * inv_d
    ex2 = jnp.sum(x * x, axis=-1, keepdims=True) * inv_d
    var = jnp.maximum(ex2 - mu * mu, 0.0)
    xn = (x - mu) * jax.lax.rsqrt(var + _EPS)
    return xn * gamma + beta


# ---------------------------------------------------------------------------
# Fused kernel (one M-tile per grid step; full layer stack inside)
# ---------------------------------------------------------------------------
def _make_fused_mlp_kernel(d_in, hidden, num_inner, pre_norm, mxu_dtype, gelu_approx):
    def kernel(*refs):
        it = iter(refs)
        x_ref = next(it)
        if pre_norm:
            pre_g_ref, pre_b_ref = next(it), next(it)
        w1_ref, b1_ref = next(it), next(it)
        if num_inner > 0:
            blk_g_ref, blk_b_ref, blk_w_ref, blk_bias_ref = (
                next(it), next(it), next(it), next(it))
        fin_g_ref, fin_b_ref, wf_ref, bf_ref = next(it), next(it), next(it), next(it)
        o_ref = next(it)

        x = x_ref[...].astype(jnp.float32)               # (tm, Din_pad), f32 elementwise path

        if pre_norm:
            h = _gelu(_layernorm(x, pre_g_ref[...], pre_b_ref[...], d_in), gelu_approx)
        else:
            h = x

        # fc1: MXU in bf16, f32 accumulate.
        h = jnp.dot(h.astype(mxu_dtype), w1_ref[...],
                    preferred_element_type=jnp.float32) + b1_ref[...]

        # Residual inner blocks: h = h + Linear(GELU(LN(h)))
        if num_inner > 0:
            def block_step(i, h):
                z = _gelu(_layernorm(h, blk_g_ref[i], blk_b_ref[i], hidden), gelu_approx)
                return h + (jnp.dot(z.astype(mxu_dtype), blk_w_ref[i],
                                    preferred_element_type=jnp.float32) + blk_bias_ref[i])
            if num_inner <= 4:
                for i in range(num_inner):                # small trip count: unroll
                    h = block_step(i, h)
            else:
                # bounds vreg live ranges / code size for deep stacks
                h = jax.lax.fori_loop(0, num_inner, block_step, h)

        # final: LN -> GELU -> Linear
        z = _gelu(_layernorm(h, fin_g_ref[...], fin_b_ref[...], hidden), gelu_approx)
        y = jnp.dot(z.astype(mxu_dtype), wf_ref[...],
                    preferred_element_type=jnp.float32) + bf_ref[...]
        o_ref[...] = y.astype(o_ref.dtype)

    return kernel


# ---------------------------------------------------------------------------
# VMEM budgeting (chip-aware) and M-tile selection
# ---------------------------------------------------------------------------
def _vmem_capacity_bytes():
    try:
        cap = getattr(pltpu.get_tpu_info(), "vmem_capacity_bytes", None)
        if cap:
            return int(cap)
    except Exception:
        pass
    return 64 * 1024 * 1024   # conservative fallback: v7x per-TC VMEM


def _estimate_vmem_bytes(tm, d_in_p, hid_p, d_out_p, num_inner, pre_norm,
                         w_isz, in_isz, out_isz, weight_buffers):
    maxd = max(d_in_p, hid_p, d_out_p)
    wbytes = (d_in_p * hid_p + num_inner * hid_p * hid_p + hid_p * d_out_p) * w_isz
    small = ((num_inner + 1) * hid_p + d_out_p) * 4           # biases (f32)
    small += (2 * (num_inner + 1) * hid_p) * 4                # LN gamma/beta (f32)
    if pre_norm:
        small += 2 * d_in_p * 4
    io = 2 * tm * (d_in_p * in_isz + d_out_p * out_isz)       # double-buffered x / out tiles
    act = tm * maxd * (4 + 4 + 4 + w_isz)                     # h + z + matmul acc (f32) + bf16 cast temp
    return weight_buffers * (wbytes + small) + io + act


def _choose_tile_m(M, tm_max, fits):
    cands = [c for c in (1024, 512, 384, 256, 128) if c <= max(tm_max, 128)]
    if M < 128:
        cands.append(_round_up(M, 8))     # tiny batch: don't pad rows all the way to 128
    best = None
    for c in sorted(set(cands), reverse=True):
        if not fits(c):
            continue
        m_p = _round_up(M, c)
        steps = m_p // c
        waste = m_p - M
        # prefer >=2 grid steps (keeps both v7x TensorCores busy), then minimal
        # M-padding waste, then the largest tile (amortizes ~0.35us/step overhead).
        key = (0 if steps >= 2 else 1, waste, -c)
        if best is None or key < best[1]:
            best = (c, key)
    return None if best is None else best[0]


# ---------------------------------------------------------------------------
# Wrapper: padding, specs, pallas_call
# ---------------------------------------------------------------------------
def mlp_forward(params, x, *, pre_norm, tm_max=1024, mxu_dtype=jnp.bfloat16,
                gelu_approx=True, out_dtype=None):
    lead_shape = x.shape[:-1]
    d_in = x.shape[-1]
    # TODO(synk): pass out_dtype=jnp.bfloat16 on v5e (single vector-store slot) if consumers allow it.
    out_dtype = out_dtype or x.dtype

    w1, b1 = params["fc1"]
    hidden = w1.shape[1]
    wf, bf_ = params["final_fc"]
    d_out = wf.shape[1]
    num_inner = len(params["blocks"])

    # Shape robustness checks.
    assert w1.shape[0] == d_in, "fc1 weight fan_in != input feature dim"
    assert wf.shape[0] == hidden, "final weight fan_in != hidden dim"
    for (g, b), (w, bb) in params["blocks"]:
        assert w.shape == (hidden, hidden) and g.shape[-1] == hidden
    if pre_norm:
        assert params["pre_ln"][0].shape[-1] == d_in

    x2d = x.reshape(-1, d_in)
    M = x2d.shape[0]

    d_in_p = _round_up(d_in, _LANE)
    hid_p = _round_up(hidden, _LANE)
    d_out_p = _round_up(d_out, _LANE)

    w_isz = jnp.dtype(mxu_dtype).itemsize
    in_isz = jnp.dtype(x2d.dtype).itemsize
    out_isz = jnp.dtype(out_dtype).itemsize

    vmem_cap = _vmem_capacity_bytes()          # 64 MiB on v7x, 128 MiB on v5e/v6e
    budget = int(vmem_cap * 0.75)              # headroom for compiler scratch / semaphores

    # Conservative accounting: weights counted double-buffered (2x) so the budget
    # still holds if the Buffered(1) single-buffer request is unsupported.
    def fits(tm):
        return _estimate_vmem_bytes(tm, d_in_p, hid_p, d_out_p, num_inner, pre_norm,
                                    w_isz, in_isz, out_isz, weight_buffers=2) <= budget

    tm_eff = _choose_tile_m(M, tm_max, fits)
    assert tm_eff is not None, (
        "MLP too large for single fused-residency kernel in this chip's VMEM; "
        "TODO(synk): fall back to per-layer K/N-tiled matmul kernels for large hidden sizes.")
    m_p = _round_up(M, tm_eff)

    def pad2(a, r, c, dt=jnp.float32):
        a = jnp.asarray(a, dt)
        return jnp.pad(a, ((0, r - a.shape[0]), (0, c - a.shape[1])))

    x_p = pad2(x2d, m_p, d_in_p, x2d.dtype)

    const_args = []
    if pre_norm:
        g, bta = params["pre_ln"]
        const_args += [pad2(g, 1, d_in_p), pad2(bta, 1, d_in_p)]
    const_args += [pad2(w1, d_in_p, hid_p, mxu_dtype),      # bf16 weights: half the HBM/VMEM traffic
                   pad2(b1, 1, hid_p)]
    if num_inner > 0:
        const_args += [
            jnp.stack([pad2(g, 1, hid_p) for (g, _), _ in params["blocks"]]),
            jnp.stack([pad2(b, 1, hid_p) for (_, b), _ in params["blocks"]]),
            jnp.stack([pad2(w, hid_p, hid_p, mxu_dtype) for _, (w, _) in params["blocks"]]),
            jnp.stack([pad2(bb, 1, hid_p) for _, (_, bb) in params["blocks"]]),
        ]
    g, bta = params["final_ln"]
    const_args += [pad2(g, 1, hid_p), pad2(bta, 1, hid_p),
                   pad2(wf, hid_p, d_out_p, mxu_dtype), pad2(bf_, 1, d_out_p)]

    est = _estimate_vmem_bytes(tm_eff, d_in_p, hid_p, d_out_p, num_inner, pre_norm,
                               w_isz, in_isz, out_isz, weight_buffers=2)
    vmem_limit = int(min(vmem_cap * 0.9, max(32 * 1024 * 1024, 2 * est)))

    kernel = _make_fused_mlp_kernel(d_in, hidden, num_inner, pre_norm, mxu_dtype, gelu_approx)

    def build_call(single_buffer_weights):
        kw = {"pipeline_mode": pl.Buffered(1)} if single_buffer_weights else {}
        in_specs = [pl.BlockSpec((tm_eff, d_in_p), lambda i: (i, 0))]
        for a in const_args:
            nd = a.ndim
            in_specs.append(pl.BlockSpec(a.shape, lambda i, _nd=nd: (0,) * _nd, **kw))
        return pl.pallas_call(
            kernel,
            out_shape=jax.ShapeDtypeStruct((m_p, d_out_p), out_dtype),
            grid=(m_p // tm_eff,),
            in_specs=in_specs,
            out_specs=pl.BlockSpec((tm_eff, d_out_p), lambda i: (i, 0)),
            compiler_params=pltpu.CompilerParams(
                dimension_semantics=("parallel",),   # M tiles independent -> megacore on v7x
                vmem_limit_bytes=vmem_limit,
            ),
        )

    try:
        # Buffered(1): constant-index weights/biases single-buffered -> 1x (not 2x) VMEM.
        out_p = build_call(True)(x_p, *const_args)
    except Exception:
        # TODO(synk): pl.Buffered(1) unsupported on this jax/libtpu -> default double buffering.
        out_p = build_call(False)(x_p, *const_args)

    return out_p[:M, :d_out].reshape(*lead_shape, d_out)


# ---------------------------------------------------------------------------
# Parameter init (deterministic, mirrors nn.Linear / nn.LayerNorm defaults)
# ---------------------------------------------------------------------------
def _init_linear(key, fan_in, fan_out):
    kw, kb = jax.random.split(key)
    bound = 1.0 / jnp.sqrt(float(fan_in))
    # Stored transposed: (fan_in, fan_out), so kernel does x @ w.
    w = jax.random.uniform(kw, (fan_in, fan_out), jnp.float32, -bound, bound)
    b = jax.random.uniform(kb, (1, fan_out), jnp.float32, -bound, bound)
    return w, b


def _init_layernorm(dim):
    return jnp.ones((1, dim), jnp.float32), jnp.zeros((1, dim), jnp.float32)


def init_mlp_params(key, input_size, hidden_size, output_size, num_inner, pre_norm):
    keys = jax.random.split(key, num_inner + 2)
    params = {}
    if pre_norm:
        params["pre_ln"] = _init_layernorm(input_size)
    params["fc1"] = _init_linear(keys[0], input_size, hidden_size)
    params["blocks"] = []
    for i in range(num_inner):
        ln = _init_layernorm(hidden_size)
        lin = _init_linear(keys[1 + i], hidden_size, hidden_size)
        params["blocks"].append((ln, lin))
    params["final_ln"] = _init_layernorm(hidden_size)
    params["final_fc"] = _init_linear(keys[-1], hidden_size, output_size)
    return params


# ---------------------------------------------------------------------------
# Pure-JAX f32 reference (mirrors MLP.forward) for verification
# ---------------------------------------------------------------------------
def _ref_ln_gelu(x, g, b, gelu_approx):
    mu = jnp.mean(x, axis=-1, keepdims=True)
    var = jnp.mean(jnp.square(x - mu), axis=-1, keepdims=True)
    xn = (x - mu) * jax.lax.rsqrt(var + _EPS) * g + b
    return jax.nn.gelu(xn, approximate=gelu_approx)


def mlp_reference(params, x, *, pre_norm, gelu_approx=True):
    lead_shape = x.shape[:-1]
    h = x.reshape(-1, x.shape[-1])
    if pre_norm:
        g, b = params["pre_ln"]
        h = _ref_ln_gelu(h, g, b, gelu_approx)
    w1, b1 = params["fc1"]
    h = h @ w1 + b1
    for (g, bta), (w, b) in params["blocks"]:
        h = h + (_ref_ln_gelu(h, g, bta, gelu_approx) @ w + b)
    g, bta = params["final_ln"]
    wf, bf_ = params["final_fc"]
    h = _ref_ln_gelu(h, g, bta, gelu_approx) @ wf + bf_
    return h.reshape(*lead_shape, h.shape[-1])


# ---------------------------------------------------------------------------
if __name__ == "__main__":
    key = jax.random.PRNGKey(0)
    k_x, k_p, k_x2, k_p2, k_x3, k_p3 = jax.random.split(key, 6)

    # Config 1: pre_norm=True, two residual blocks (batch=2, seq=8, input=32), approx GELU.
    batch, seq = 2, 8
    input_size, hidden_size, output_size = 32, 64, 16
    x = jax.random.normal(k_x, (batch, seq, input_size), jnp.float32)
    params = init_mlp_params(k_p, input_size, hidden_size, output_size, 2, True)
    out = jax.block_until_ready(mlp_forward(params, x, pre_norm=True, gelu_approx=True))
    ref = mlp_reference(params, x, pre_norm=True, gelu_approx=True)
    assert out.shape == (batch, seq, output_size)
    # Matmuls run on the MXU in bf16 with f32 accumulation -> compare loosely vs f32 reference.
    assert jnp.allclose(out, ref, atol=2e-2, rtol=2e-2), "config-1 mismatch vs reference"

    # Config 2: no pre_norm, no inner blocks, ragged row count, exact erf GELU (PyTorch parity path).
    batch2, seq2 = 3, 5
    in2, hid2, out2 = 48, 96, 24
    x2 = jax.random.normal(k_x2, (batch2, seq2, in2), jnp.float32)
    params2 = init_mlp_params(k_p2, in2, hid2, out2, 0, False)
    o2 = jax.block_until_ready(mlp_forward(params2, x2, pre_norm=False, gelu_approx=False))
    r2 = mlp_reference(params2, x2, pre_norm=False, gelu_approx=False)
    assert o2.shape == (batch2, seq2, out2)
    assert jnp.allclose(o2, r2, atol=2e-2, rtol=2e-2), "config-2 mismatch vs reference"

    # Config 3: deep stack (num_inner=6) exercising the fori_loop / dynamic ref-index path.
    batch3, seq3 = 4, 16
    in3, hid3, out3 = 32, 128, 32
    x3 = jax.random.normal(k_x3, (batch3, seq3, in3), jnp.float32)
    params3 = init_mlp_params(k_p3, in3, hid3, out3, 6, True)
    o3 = jax.block_until_ready(mlp_forward(params3, x3, pre_norm=True, gelu_approx=True))
    r3 = mlp_reference(params3, x3, pre_norm=True, gelu_approx=True)
    assert o3.shape == (batch3, seq3, out3)
    assert jnp.allclose(o3, r3, atol=3e-2, rtol=3e-2), "config-3 mismatch vs reference"

    print("KERNEL_OK")
</pallas_src>

<mosaic_0001>
module attributes {stable_mosaic.version = 11 : i64} {
  func.func @kernel(%arg0: i32, %arg1: memref<16x128xf32, #tpu.memory_space<vmem>>, %arg2: memref<1x128xf32, #tpu.memory_space<vmem>>, %arg3: memref<1x128xf32, #tpu.memory_space<vmem>>, %arg4: memref<128x128xbf16, #tpu.memory_space<vmem>>, %arg5: memref<1x128xf32, #tpu.memory_space<vmem>>, %arg6: memref<2x1x128xf32, #tpu.memory_space<vmem>>, %arg7: memref<2x1x128xf32, #tpu.memory_space<vmem>>, %arg8: memref<2x128x128xbf16, #tpu.memory_space<vmem>>, %arg9: memref<2x1x128xf32, #tpu.memory_space<vmem>>, %arg10: memref<1x128xf32, #tpu.memory_space<vmem>>, %arg11: memref<1x128xf32, #tpu.memory_space<vmem>>, %arg12: memref<128x128xbf16, #tpu.memory_space<vmem>>, %arg13: memref<1x128xf32, #tpu.memory_space<vmem>>, %arg14: memref<16x128xf32, #tpu.memory_space<vmem>>) attributes {dimension_semantics = [#tpu.dimension_semantics<parallel>], iteration_bounds = array<i64: 1>, scalar_prefetch = 0 : i64, scratch_operands = 0 : i64, tpu.core_type = #tpu.core_type<tc>, window_params = [{transform_indices = @transform_0, window_bounds = array<i64: 16, 128>}, {pipeline_mode = #tpu.pipeline_mode<synchronous>, transform_indices = @transform_1, window_bounds = array<i64: 1, 128>}, {pipeline_mode = #tpu.pipeline_mode<synchronous>, transform_indices = @transform_2, window_bounds = array<i64: 1, 128>}, {pipeline_mode = #tpu.pipeline_mode<synchronous>, transform_indices = @transform_3, window_bounds = array<i64: 128, 128>}, {pipeline_mode = #tpu.pipeline_mode<synchronous>, transform_indices = @transform_4, window_bounds = array<i64: 1, 128>}, {pipeline_mode = #tpu.pipeline_mode<synchronous>, transform_indices = @transform_5, window_bounds = array<i64: 2, 1, 128>}, {pipeline_mode = #tpu.pipeline_mode<synchronous>, transform_indices = @transform_6, window_bounds = array<i64: 2, 1, 128>}, {pipeline_mode = #tpu.pipeline_mode<synchronous>, transform_indices = @transform_7, window_bounds = array<i64: 2, 128, 128>}, {pipeline_mode = #tpu.pipeline_mode<synchronous>, transform_indices = @transform_8, window_bounds = array<i64: 2, 1, 128>}, {pipeline_mode = #tpu.pipeline_mode<synchronous>, transform_indices = @transform_9, window_bounds = array<i64: 1, 128>}, {pipeline_mode = #tpu.pipeline_mode<synchronous>, transform_indices = @transform_10, window_bounds = array<i64: 1, 128>}, {pipeline_mode = #tpu.pipeline_mode<synchronous>, transform_indices = @transform_11, window_bounds = array<i64: 128, 128>}, {pipeline_mode = #tpu.pipeline_mode<synchronous>, transform_indices = @transform_12, window_bounds = array<i64: 1, 128>}, {transform_indices = @transform_13, window_bounds = array<i64: 16, 128>}]} {
    %c0 = arith.constant 0 : index
    %c0_0 = arith.constant 0 : index
    %0 = vector.load %arg1[%c0, %c0_0] : memref<16x128xf32, #tpu.memory_space<vmem>>, vector<16x128xf32>
    %c0_1 = arith.constant 0 : index
    %c0_2 = arith.constant 0 : index
    %1 = vector.load %arg2[%c0_1, %c0_2] : memref<1x128xf32, #tpu.memory_space<vmem>>, vector<1x128xf32>
    %c0_3 = arith.constant 0 : index
    %c0_4 = arith.constant 0 : index
    %2 = vector.load %arg3[%c0_3, %c0_4] : memref<1x128xf32, #tpu.memory_space<vmem>>, vector<1x128xf32>
    %cst = arith.constant dense<0.000000e+00> : vector<16xf32>
    %3 = vector.multi_reduction <add>, %0, %cst [1] : vector<16x128xf32> to vector<16xf32>
    %4 = vector.shape_cast %3 : vector<16xf32> to vector<16x1xf32>
    %cst_5 = arith.constant 3.125000e-02 : f32
    %5 = vector.broadcast %cst_5 : f32 to vector<16x1xf32>
    %6 = arith.mulf %4, %5 : vector<16x1xf32>
    %7 = arith.mulf %0, %0 : vector<16x128xf32>
    %cst_6 = arith.constant dense<0.000000e+00> : vector<16xf32>
    %8 = vector.multi_reduction <add>, %7, %cst_6 [1] : vector<16x128xf32> to vector<16xf32>
    %9 = vector.shape_cast %8 : vector<16xf32> to vector<16x1xf32>
    %cst_7 = arith.constant 3.125000e-02 : f32
    %10 = vector.broadcast %cst_7 : f32 to vector<16x1xf32>
    %11 = arith.mulf %9, %10 : vector<16x1xf32>
    %12 = arith.mulf %6, %6 : vector<16x1xf32>
    %13 = arith.subf %11, %12 : vector<16x1xf32>
    %cst_8 = arith.constant 0.000000e+00 : f32
    %14 = vector.broadcast %cst_8 : f32 to vector<16x1xf32>
    %15 = arith.maximumf %13, %14 : vector<16x1xf32>
    %16 = vector.broadcast %6 : vector<16x1xf32> to vector<16x128xf32>
    %17 = arith.subf %0, %16 : vector<16x128xf32>
    %cst_9 = arith.constant 9.99999974E-6 : f32
    %18 = vector.broadcast %cst_9 : f32 to vector<16x1xf32>
    %19 = arith.addf %15, %18 : vector<16x1xf32>
    %20 = math.rsqrt %19 : vector<16x1xf32>
    %21 = vector.broadcast %20 : vector<16x1xf32> to vector<16x128xf32>
    %22 = arith.mulf %17, %21 : vector<16x128xf32>
    %23 = vector.broadcast %1 : vector<1x128xf32> to vector<16x128xf32>
    %24 = arith.mulf %22, %23 : vector<16x128xf32>
    %25 = vector.broadcast %2 : vector<1x128xf32> to vector<16x128xf32>
    %26 = arith.addf %24, %25 : vector<16x128xf32>
    %27 = arith.mulf %26, %26 : vector<16x128xf32>
    %28 = arith.mulf %26, %27 : vector<16x128xf32>
    %cst_10 = arith.constant 4.471500e-02 : f32
    %29 = vector.broadcast %cst_10 : f32 to vector<16x128xf32>
    %30 = arith.mulf %29, %28 : vector<16x128xf32>
    %31 = arith.addf %26, %30 : vector<16x128xf32>
    %cst_11 = arith.constant 0.797884583 : f32
    %32 = vector.broadcast %cst_11 : f32 to vector<16x128xf32>
    %33 = arith.mulf %32, %31 : vector<16x128xf32>
    %34 = math.tanh %33 : vector<16x128xf32>
    %cst_12 = arith.constant 1.000000e+00 : f32
    %35 = vector.broadcast %cst_12 : f32 to vector<16x128xf32>
    %36 = arith.addf %35, %34 : vector<16x128xf32>
    %cst_13 = arith.constant 5.000000e-01 : f32
    %37 = vector.broadcast %cst_13 : f32 to vector<16x128xf32>
    %38 = arith.mulf %37, %36 : vector<16x128xf32>
    %39 = arith.mulf %26, %38 : vector<16x128xf32>
    %40 = arith.truncf %39 : vector<16x128xf32> to vector<16x128xbf16>
    %c0_14 = arith.constant 0 : index
    %c0_15 = arith.constant 0 : index
    %41 = vector.load %arg4[%c0_14, %c0_15] : memref<128x128xbf16, #tpu.memory_space<vmem>>, vector<128x128xbf16>
    %cst_16 = arith.constant dense<0.000000e+00> : vector<16x128xf32>
    %42 = tpu.matmul %40, %41, %cst_16 {dimension_numbers = #tpu.dot_dimension_numbers<[1], [0], [0], [1], [0, 0, 1, 1], [], []>} : vector<16x128xbf16>, vector<128x128xbf16>, vector<16x128xf32> -> vector<16x128xf32>
    %c0_17 = arith.constant 0 : index
    %c0_18 = arith.constant 0 : index
    %43 = vector.load %arg5[%c0_17, %c0_18] : memref<1x128xf32, #tpu.memory_space<vmem>>, vector<1x128xf32>
    %44 = vector.broadcast %43 : vector<1x128xf32> to vector<16x128xf32>
    %45 = arith.addf %42, %44 : vector<16x128xf32>
    %c0_19 = arith.constant 0 : index
    %c0_20 = arith.constant 0 : index
    %c0_21 = arith.constant 0 : index
    %46 = vector.load %arg6[%c0_19, %c0_20, %c0_21] : memref<2x1x128xf32, #tpu.memory_space<vmem>>, vector<1x1x128xf32>
    %47 = vector.shape_cast %46 : vector<1x1x128xf32> to vector<1x128xf32>
    %c0_22 = arith.constant 0 : index
    %c0_23 = arith.constant 0 : index
    %c0_24 = arith.constant 0 : index
    %48 = vector.load %arg7[%c0_22, %c0_23, %c0_24] : memref<2x1x128xf32, #tpu.memory_space<vmem>>, vector<1x1x128xf32>
    %49 = vector.shape_cast %48 : vector<1x1x128xf32> to vector<1x128xf32>
    %cst_25 = arith.constant dense<0.000000e+00> : vector<16xf32>
    %50 = vector.multi_reduction <add>, %45, %cst_25 [1] : vector<16x128xf32> to vector<16xf32>
    %51 = vector.shape_cast %50 : vector<16xf32> to vector<16x1xf32>
    %cst_26 = arith.constant 1.562500e-02 : f32
    %52 = vector.broadcast %cst_26 : f32 to vector<16x1xf32>
    %53 = arith.mulf %51, %52 : vector<16x1xf32>
    %54 = arith.mulf %45, %45 : vector<16x128xf32>
    %cst_27 = arith.constant dense<0.000000e+00> : vector<16xf32>
    %55 = vector.multi_reduction <add>, %54, %cst_27 [1] : vector<16x128xf32> to vector<16xf32>
    %56 = vector.shape_cast %55 : vector<16xf32> to vector<16x1xf32>
    %cst_28 = arith.constant 1.562500e-02 : f32
    %57 = vector.broadcast %cst_28 : f32 to vector<16x1xf32>
    %58 = arith.mulf %56, %57 : vector<16x1xf32>
    %59 = arith.mulf %53, %53 : vector<16x1xf32>
    %60 = arith.subf %58, %59 : vector<16x1xf32>
    %cst_29 = arith.constant 0.000000e+00 : f32
    %61 = vector.broadcast %cst_29 : f32 to vector<16x1xf32>
    %62 = arith.maximumf %60, %61 : vector<16x1xf32>
    %63 = vector.broadcast %53 : vector<16x1xf32> to vector<16x128xf32>
    %64 = arith.subf %45, %63 : vector<16x128xf32>
    %cst_30 = arith.constant 9.99999974E-6 : f32
    %65 = vector.broadcast %cst_30 : f32 to vector<16x1xf32>
    %66 = arith.addf %62, %65 : vector<16x1xf32>
    %67 = math.rsqrt %66 : vector<16x1xf32>
    %68 = vector.broadcast %67 : vector<16x1xf32> to vector<16x128xf32>
    %69 = arith.mulf %64, %68 : vector<16x128xf32>
    %70 = vector.broadcast %47 : vector<1x128xf32> to vector<16x128xf32>
    %71 = arith.mulf %69, %70 : vector<16x128xf32>
    %72 = vector.broadcast %49 : vector<1x128xf32> to vector<16x128xf32>
    %73 = arith.addf %71, %72 : vector<16x128xf32>
    %74 = arith.mulf %73, %73 : vector<16x128xf32>
    %75 = arith.mulf %73, %74 : vector<16x128xf32>
    %cst_31 = arith.constant 4.471500e-02 : f32
    %76 = vector.broadcast %cst_31 : f32 to vector<16x128xf32>
    %77 = arith.mulf %76, %75 : vector<16x128xf32>
    %78 = arith.addf %73, %77 : vector<16x128xf32>
    %cst_32 = arith.constant 0.797884583 : f32
    %79 = vector.broadcast %cst_32 : f32 to vector<16x128xf32>
    %80 = arith.mulf %79, %78 : vector<16x128xf32>
    %81 = math.tanh %80 : vector<16x128xf32>
    %cst_33 = arith.constant 1.000000e+00 : f32
    %82 = vector.broadcast %cst_33 : f32 to vector<16x128xf32>
    %83 = arith.addf %82, %81 : vector<16x128xf32>
    %cst_34 = arith.constant 5.000000e-01 : f32
    %84 = vector.broadcast %cst_34 : f32 to vector<16x128xf32>
    %85 = arith.mulf %84, %83 : vector<16x128xf32>
    %86 = arith.mulf %73, %85 : vector<16x128xf32>
    %87 = arith.truncf %86 : vector<16x128xf32> to vector<16x128xbf16>
    %c0_35 = arith.constant 0 : index
    %c0_36 = arith.constant 0 : index
    %c0_37 = arith.constant 0 : index
    %88 = vector.load %arg8[%c0_35, %c0_36, %c0_37] : memref<2x128x128xbf16, #tpu.memory_space<vmem>>, vector<1x128x128xbf16>
    %89 = vector.shape_cast %88 : vector<1x128x128xbf16> to vector<128x128xbf16>
    %cst_38 = arith.constant dense<0.000000e+00> : vector<16x128xf32>
    %90 = tpu.matmul %87, %89, %cst_38 {dimension_numbers = #tpu.dot_dimension_numbers<[1], [0], [0], [1], [0, 0, 1, 1], [], []>} : vector<16x128xbf16>, vector<128x128xbf16>, vector<16x128xf32> -> vector<16x128xf32>
    %c0_39 = arith.constant 0 : index
    %c0_40 = arith.constant 0 : index
    %c0_41 = arith.constant 0 : index
    %91 = vector.load %arg9[%c0_39, %c0_40, %c0_41] : memref<2x1x128xf32, #tpu.memory_space<vmem>>, vector<1x1x128xf32>
    %92 = vector.shape_cast %91 : vector<1x1x128xf32> to vector<1x128xf32>
    %93 = vector.broadcast %92 : vector<1x128xf32> to vector<16x128xf32>
    %94 = arith.addf %90, %93 : vector<16x128xf32>
    %95 = arith.addf %45, %94 : vector<16x128xf32>
    %c1 = arith.constant 1 : index
    %c0_42 = arith.constant 0 : index
    %c0_43 = arith.constant 0 : index
    %96 = vector.load %arg6[%c1, %c0_42, %c0_43] : memref<2x1x128xf32, #tpu.memory_space<vmem>>, vector<1x1x128xf32>
    %97 = vector.shape_cast %96 : vector<1x1x128xf32> to vector<1x128xf32>
    %c1_44 = arith.constant 1 : index
    %c0_45 = arith.constant 0 : index
    %c0_46 = arith.constant 0 : index
    %98 = vector.load %arg7[%c1_44, %c0_45, %c0_46] : memref<2x1x128xf32, #tpu.memory_space<vmem>>, vector<1x1x128xf32>
    %99 = vector.shape_cast %98 : vector<1x1x128xf32> to vector<1x128xf32>
    %cst_47 = arith.constant dense<0.000000e+00> : vector<16xf32>
    %100 = vector.multi_reduction <add>, %95, %cst_47 [1] : vector<16x128xf32> to vector<16xf32>
    %101 = vector.shape_cast %100 : vector<16xf32> to vector<16x1xf32>
    %cst_48 = arith.constant 1.562500e-02 : f32
    %102 = vector.broadcast %cst_48 : f32 to vector<16x1xf32>
    %103 = arith.mulf %101, %102 : vector<16x1xf32>
    %104 = arith.mulf %95, %95 : vector<16x128xf32>
    %cst_49 = arith.constant dense<0.000000e+00> : vector<16xf32>
    %105 = vector.multi_reduction <add>, %104, %cst_49 [1] : vector<16x128xf32> to vector<16xf32>
    %106 = vector.shape_cast %105 : vector<16xf32> to vector<16x1xf32>
    %cst_50 = arith.constant 1.562500e-02 : f32
    %107 = vector.broadcast %cst_50 : f32 to vector<16x1xf32>
    %108 = arith.mulf %106, %107 : vector<16x1xf32>
    %109 = arith.mulf %103, %103 : vector<16x1xf32>
    %110 = arith.subf %108, %109 : vector<16x1xf32>
    %cst_51 = arith.constant 0.000000e+00 : f32
    %111 = vector.broadcast %cst_51 : f32 to vector<16x1xf32>
    %112 = arith.maximumf %110, %111 : vector<16x1xf32>
    %113 = vector.broadcast %103 : vector<16x1xf32> to vector<16x128xf32>
    %114 = arith.subf %95, %113 : vector<16x128xf32>
    %cst_52 = arith.constant 9.99999974E-6 : f32
    %115 = vector.broadcast %cst_52 : f32 to vector<16x1xf32>
    %116 = arith.addf %112, %115 : vector<16x1xf32>
    %117 = math.rsqrt %116 : vector<16x1xf32>
    %118 = vector.broadcast %117 : vector<16x1xf32> to vector<16x128xf32>
    %119 = arith.mulf %114, %118 : vector<16x128xf32>
    %120 = vector.broadcast %97 : vector<1x128xf32> to vector<16x128xf32>
    %121 = arith.mulf %119, %120 : vector<16x128xf32>
    %122 = vector.broadcast %99 : vector<1x128xf32> to vector<16x128xf32>
    %123 = arith.addf %121, %122 : vector<16x128xf32>
    %124 = arith.mulf %123, %123 : vector<16x128xf32>
    %125 = arith.mulf %123, %124 : vector<16x128xf32>
    %cst_53 = arith.constant 4.471500e-02 : f32
    %126 = vector.broadcast %cst_53 : f32 to vector<16x128xf32>
    %127 = arith.mulf %126, %125 : vector<16x128xf32>
    %128 = arith.addf %123, %127 : vector<16x128xf32>
    %cst_54 = arith.constant 0.797884583 : f32
    %129 = vector.broadcast %cst_54 : f32 to vector<16x128xf32>
    %130 = arith.mulf %129, %128 : vector<16x128xf32>
    %131 = math.tanh %130 : vector<16x128xf32>
    %cst_55 = arith.constant 1.000000e+00 : f32
    %132 = vector.broadcast %cst_55 : f32 to vector<16x128xf32>
    %133 = arith.addf %132, %131 : vector<16x128xf32>
    %cst_56 = arith.constant 5.000000e-01 : f32
    %134 = vector.broadcast %cst_56 : f32 to vector<16x128xf32>
    %135 = arith.mulf %134, %133 : vector<16x128xf32>
    %136 = arith.mulf %123, %135 : vector<16x128xf32>
    %137 = arith.truncf %136 : vector<16x128xf32> to vector<16x128xbf16>
    %c1_57 = arith.constant 1 : index
    %c0_58 = arith.constant 0 : index
    %c0_59 = arith.constant 0 : index
    %138 = vector.load %arg8[%c1_57, %c0_58, %c0_59] : memref<2x128x128xbf16, #tpu.memory_space<vmem>>, vector<1x128x128xbf16>
    %139 = vector.shape_cast %138 : vector<1x128x128xbf16> to vector<128x128xbf16>
    %cst_60 = arith.constant dense<0.000000e+00> : vector<16x128xf32>
    %140 = tpu.matmul %137, %139, %cst_60 {dimension_numbers = #tpu.dot_dimension_numbers<[1], [0], [0], [1], [0, 0, 1, 1], [], []>} : vector<16x128xbf16>, vector<128x128xbf16>, vector<16x128xf32> -> vector<16x128xf32>
    %c1_61 = arith.constant 1 : index
    %c0_62 = arith.constant 0 : index
    %c0_63 = arith.constant 0 : index
    %141 = vector.load %arg9[%c1_61, %c0_62, %c0_63] : memref<2x1x128xf32, #tpu.memory_space<vmem>>, vector<1x1x128xf32>
    %142 = vector.shape_cast %141 : vector<1x1x128xf32> to vector<1x128xf32>
    %143 = vector.broadcast %142 : vector<1x128xf32> to vector<16x128xf32>
    %144 = arith.addf %140, %143 : vector<16x128xf32>
    %145 = arith.addf %95, %144 : vector<16x128xf32>
    %c0_64 = arith.constant 0 : index
    %c0_65 = arith.constant 0 : index
    %146 = vector.load %arg10[%c0_64, %c0_65] : memref<1x128xf32, #tpu.memory_space<vmem>>, vector<1x128xf32>
    %c0_66 = arith.constant 0 : index
    %c0_67 = arith.constant 0 : index
    %147 = vector.load %arg11[%c0_66, %c0_67] : memref<1x128xf32, #tpu.memory_space<vmem>>, vector<1x128xf32>
    %cst_68 = arith.constant dense<0.000000e+00> : vector<16xf32>
    %148 = vector.multi_reduction <add>, %145, %cst_68 [1] : vector<16x128xf32> to vector<16xf32>
    %149 = vector.shape_cast %148 : vector<16xf32> to vector<16x1xf32>
    %cst_69 = arith.constant 1.562500e-02 : f32
    %150 = vector.broadcast %cst_69 : f32 to vector<16x1xf32>
    %151 = arith.mulf %149, %150 : vector<16x1xf32>
    %152 = arith.mulf %145, %145 : vector<16x128xf32>
    %cst_70 = arith.constant dense<0.000000e+00> : vector<16xf32>
    %153 = vector.multi_reduction <add>, %152, %cst_70 [1] : vector<16x128xf32> to vector<16xf32>
    %154 = vector.shape_cast %153 : vector<16xf32> to vector<16x1xf32>
    %cst_71 = arith.constant 1.562500e-02 : f32
    %155 = vector.broadcast %cst_71 : f32 to vector<16x1xf32>
    %156 = arith.mulf %154, %155 : vector<16x1xf32>
    %157 = arith.mulf %151, %151 : vector<16x1xf32>
    %158 = arith.subf %156, %157 : vector<16x1xf32>
    %cst_72 = arith.constant 0.000000e+00 : f32
    %159 = vector.broadcast %cst_72 : f32 to vector<16x1xf32>
    %160 = arith.maximumf %158, %159 : vector<16x1xf32>
    %161 = vector.broadcast %151 : vector<16x1xf32> to vector<16x128xf32>
    %162 = arith.subf %145, %161 : vector<16x128xf32>
    %cst_73 = arith.constant 9.99999974E-6 : f32
    %163 = vector.broadcast %cst_73 : f32 to vector<16x1xf32>
    %164 = arith.addf %160, %163 : vector<16x1xf32>
    %165 = math.rsqrt %164 : vector<16x1xf32>
    %166 = vector.broadcast %165 : vector<16x1xf32> to vector<16x128xf32>
    %167 = arith.mulf %162, %166 : vector<16x128xf32>
    %168 = vector.broadcast %146 : vector<1x128xf32> to vector<16x128xf32>
    %169 = arith.mulf %167, %168 : vector<16x128xf32>
    %170 = vector.broadcast %147 : vector<1x128xf32> to vector<16x128xf32>
    %171 = arith.addf %169, %170 : vector<16x128xf32>
    %172 = arith.mulf %171, %171 : vector<16x128xf32>
    %173 = arith.mulf %171, %172 : vector<16x128xf32>
    %cst_74 = arith.constant 4.471500e-02 : f32
    %174 = vector.broadcast %cst_74 : f32 to vector<16x128xf32>
    %175 = arith.mulf %174, %173 : vector<16x128xf32>
    %176 = arith.addf %171, %175 : vector<16x128xf32>
    %cst_75 = arith.constant 0.797884583 : f32
    %177 = vector.broadcast %cst_75 : f32 to vector<16x128xf32>
    %178 = arith.mulf %177, %176 : vector<16x128xf32>
    %179 = math.tanh %178 : vector<16x128xf32>
    %cst_76 = arith.constant 1.000000e+00 : f32
    %180 = vector.broadcast %cst_76 : f32 to vector<16x128xf32>
    %181 = arith.addf %180, %179 : vector<16x128xf32>
    %cst_77 = arith.constant 5.000000e-01 : f32
    %182 = vector.broadcast %cst_77 : f32 to vector<16x128xf32>
    %183 = arith.mulf %182, %181 : vector<16x128xf32>
    %184 = arith.mulf %171, %183 : vector<16x128xf32>
    %185 = arith.truncf %184 : vector<16x128xf32> to vector<16x128xbf16>
    %c0_78 = arith.constant 0 : index
    %c0_79 = arith.constant 0 : index
    %186 = vector.load %arg12[%c0_78, %c0_79] : memref<128x128xbf16, #tpu.memory_space<vmem>>, vector<128x128xbf16>
    %cst_80 = arith.constant dense<0.000000e+00> : vector<16x128xf32>
    %187 = tpu.matmul %185, %186, %cst_80 {dimension_numbers = #tpu.dot_dimension_numbers<[1], [0], [0], [1], [0, 0, 1, 1], [], []>} : vector<16x128xbf16>, vector<128x128xbf16>, vector<16x128xf32> -> vector<16x128xf32>
    %c0_81 = arith.constant 0 : index
    %c0_82 = arith.constant 0 : index
    %188 = vector.load %arg13[%c0_81, %c0_82] : memref<1x128xf32, #tpu.memory_space<vmem>>, vector<1x128xf32>
    %189 = vector.broadcast %188 : vector<1x128xf32> to vector<16x128xf32>
    %190 = arith.addf %187, %189 : vector<16x128xf32>
    %c0_83 = arith.constant 0 : index
    %c0_84 = arith.constant 0 : index
    %191 = vector.load %arg14[%c0_83, %c0_84] : memref<16x128xf32, #tpu.memory_space<vmem>>, vector<16x128xf32>
    tpu.vector_store %arg14[%c0_83, %c0_84], %190 {strides = array<i32>} : memref<16x128xf32, #tpu.memory_space<vmem>>, vector<16x128xf32>,
    return
  }
  func.func @transform_0(%arg0: i32) -> (i32, i32) {
    %c0_i32 = arith.constant 0 : i32
    %c0_i32_0 = arith.constant 0 : i32
    return %arg0, %c0_i32 : i32, i32
  }
  func.func @transform_1(%arg0: i32) -> (i32, i32) {
    %c0_i32 = arith.constant 0 : i32
    %c0_i32_0 = arith.constant 0 : i32
    %c0_i32_1 = arith.constant 0 : i32
    return %c0_i32, %c0_i32_0 : i32, i32
  }
  func.func @transform_2(%arg0: i32) -> (i32, i32) {
    %c0_i32 = arith.constant 0 : i32
    %c0_i32_0 = arith.constant 0 : i32
    %c0_i32_1 = arith.constant 0 : i32
    return %c0_i32, %c0_i32_0 : i32, i32
  }
  func.func @transform_3(%arg0: i32) -> (i32, i32) {
    %c0_i32 = arith.constant 0 : i32
    %c0_i32_0 = arith.constant 0 : i32
    %c0_i32_1 = arith.constant 0 : i32
    return %c0_i32, %c0_i32_0 : i32, i32
  }
  func.func @transform_4(%arg0: i32) -> (i32, i32) {
    %c0_i32 = arith.constant 0 : i32
    %c0_i32_0 = arith.constant 0 : i32
    %c0_i32_1 = arith.constant 0 : i32
    return %c0_i32, %c0_i32_0 : i32, i32
  }
  func.func @transform_5(%arg0: i32) -> (i32, i32, i32) {
    %c0_i32 = arith.constant 0 : i32
    %c0_i32_0 = arith.constant 0 : i32
    %c0_i32_1 = arith.constant 0 : i32
    %c0_i32_2 = arith.constant 0 : i32
    return %c0_i32, %c0_i32_0, %c0_i32_1 : i32, i32, i32
  }
  func.func @transform_6(%arg0: i32) -> (i32, i32, i32) {
    %c0_i32 = arith.constant 0 : i32
    %c0_i32_0 = arith.constant 0 : i32
    %c0_i32_1 = arith.constant 0 : i32
    %c0_i32_2 = arith.constant 0 : i32
    return %c0_i32, %c0_i32_0, %c0_i32_1 : i32, i32, i32
  }
  func.func @transform_7(%arg0: i32) -> (i32, i32, i32) {
    %c0_i32 = arith.constant 0 : i32
    %c0_i32_0 = arith.constant 0 : i32
    %c0_i32_1 = arith.constant 0 : i32
    %c0_i32_2 = arith.constant 0 : i32
    return %c0_i32, %c0_i32_0, %c0_i32_1 : i32, i32, i32
  }
  func.func @transform_8(%arg0: i32) -> (i32, i32, i32) {
    %c0_i32 = arith.constant 0 : i32
    %c0_i32_0 = arith.constant 0 : i32
    %c0_i32_1 = arith.constant 0 : i32
    %c0_i32_2 = arith.constant 0 : i32
    return %c0_i32, %c0_i32_0, %c0_i32_1 : i32, i32, i32
  }
  func.func @transform_9(%arg0: i32) -> (i32, i32) {
    %c0_i32 = arith.constant 0 : i32
    %c0_i32_0 = arith.constant 0 : i32
    %c0_i32_1 = arith.constant 0 : i32
    return %c0_i32, %c0_i32_0 : i32, i32
  }
  func.func @transform_10(%arg0: i32) -> (i32, i32) {
    %c0_i32 = arith.constant 0 : i32
    %c0_i32_0 = arith.constant 0 : i32
    %c0_i32_1 = arith.constant 0 : i32
    return %c0_i32, %c0_i32_0 : i32, i32
  }
  func.func @transform_11(%arg0: i32) -> (i32, i32) {
    %c0_i32 = arith.constant 0 : i32
    %c0_i32_0 = arith.constant 0 : i32
    %c0_i32_1 = arith.constant 0 : i32
    return %c0_i32, %c0_i32_0 : i32, i32
  }
  func.func @transform_12(%arg0: i32) -> (i32, i32) {
    %c0_i32 = arith.constant 0 : i32
    %c0_i32_0 = arith.constant 0 : i32
    %c0_i32_1 = arith.constant 0 : i32
    return %c0_i32, %c0_i32_0 : i32, i32
  }
  func.func @transform_13(%arg0: i32) -> (i32, i32) {
    %c0_i32 = arith.constant 0 : i32
    %c0_i32_0 = arith.constant 0 : i32
    return %arg0, %c0_i32 : i32, i32
  }
}

module attributes {stable_mosaic.version = 11 : i64} {
  func.func @kernel(%arg0: i32, %arg1: memref<16x128xf32, #tpu.memory_space<vmem>>, %arg2: memref<1x128xf32, #tpu.memory_space<vmem>>, %arg3: memref<1x128xf32, #tpu.memory_space<vmem>>, %arg4: memref<128x128xbf16, #tpu.memory_space<vmem>>, %arg5: memref<1x128xf32, #tpu.memory_space<vmem>>, %arg6: memref<2x1x128xf32, #tpu.memory_space<vmem>>, %arg7: memref<2x1x128xf32, #tpu.memory_space<vmem>>, %arg8: memref<2x128x128xbf16, #tpu.memory_space<vmem>>, %arg9: memref<2x1x128xf32, #tpu.memory_space<vmem>>, %arg10: memref<1x128xf32, #tpu.memory_space<vmem>>, %arg11: memref<1x128xf32, #tpu.memory_space<vmem>>, %arg12: memref<128x128xbf16, #tpu.memory_space<vmem>>, %arg13: memref<1x128xf32, #tpu.memory_space<vmem>>, %arg14: memref<16x128xf32, #tpu.memory_space<vmem>>) attributes {dimension_semantics = [#tpu.dimension_semantics<parallel>], iteration_bounds = array<i64: 1>, scalar_prefetch = 0 : i64, scratch_operands = 0 : i64, tpu.core_type = #tpu.core_type<tc>, window_params = [{transform_indices = @transform_0, window_bounds = array<i64: 16, 128>}, {pipeline_mode = #tpu.pipeline_mode<synchronous>, transform_indices = @transform_1, window_bounds = array<i64: 1, 128>}, {pipeline_mode = #tpu.pipeline_mode<synchronous>, transform_indices = @transform_2, window_bounds = array<i64: 1, 128>}, {pipeline_mode = #tpu.pipeline_mode<synchronous>, transform_indices = @transform_3, window_bounds = array<i64: 128, 128>}, {pipeline_mode = #tpu.pipeline_mode<synchronous>, transform_indices = @transform_4, window_bounds = array<i64: 1, 128>}, {pipeline_mode = #tpu.pipeline_mode<synchronous>, transform_indices = @transform_5, window_bounds = array<i64: 2, 1, 128>}, {pipeline_mode = #tpu.pipeline_mode<synchronous>, transform_indices = @transform_6, window_bounds = array<i64: 2, 1, 128>}, {pipeline_mode = #tpu.pipeline_mode<synchronous>, transform_indices = @transform_7, window_bounds = array<i64: 2, 128, 128>}, {pipeline_mode = #tpu.pipeline_mode<synchronous>, transform_indices = @transform_8, window_bounds = array<i64: 2, 1, 128>}, {pipeline_mode = #tpu.pipeline_mode<synchronous>, transform_indices = @transform_9, window_bounds = array<i64: 1, 128>}, {pipeline_mode = #tpu.pipeline_mode<synchronous>, transform_indices = @transform_10, window_bounds = array<i64: 1, 128>}, {pipeline_mode = #tpu.pipeline_mode<synchronous>, transform_indices = @transform_11, window_bounds = array<i64: 128, 128>}, {pipeline_mode = #tpu.pipeline_mode<synchronous>, transform_indices = @transform_12, window_bounds = array<i64: 1, 128>}, {transform_indices = @transform_13, window_bounds = array<i64: 16, 128>}]} {
    %c0 = arith.constant 0 : index
    %c0_0 = arith.constant 0 : index
    %0 = vector.load %arg1[%c0, %c0_0] : memref<16x128xf32, #tpu.memory_space<vmem>>, vector<16x128xf32>
    %c0_1 = arith.constant 0 : index
    %c0_2 = arith.constant 0 : index
    %1 = vector.load %arg2[%c0_1, %c0_2] : memref<1x128xf32, #tpu.memory_space<vmem>>, vector<1x128xf32>
    %c0_3 = arith.constant 0 : index
    %c0_4 = arith.constant 0 : index
    %2 = vector.load %arg3[%c0_3, %c0_4] : memref<1x128xf32, #tpu.memory_space<vmem>>, vector<1x128xf32>
    %cst = arith.constant dense<0.000000e+00> : vector<16xf32>
    %3 = vector.multi_reduction <add>, %0, %cst [1] : vector<16x128xf32> to vector<16xf32>
    %4 = vector.shape_cast %3 : vector<16xf32> to vector<16x1xf32>
    %cst_5 = arith.constant 3.125000e-02 : f32
    %5 = vector.broadcast %cst_5 : f32 to vector<16x1xf32>
    %6 = arith.mulf %4, %5 : vector<16x1xf32>
    %7 = arith.mulf %0, %0 : vector<16x128xf32>
    %cst_6 = arith.constant dense<0.000000e+00> : vector<16xf32>
    %8 = vector.multi_reduction <add>, %7, %cst_6 [1] : vector<16x128xf32> to vector<16xf32>
    %9 = vector.shape_cast %8 : vector<16xf32> to vector<16x1xf32>
    %cst_7 = arith.constant 3.125000e-02 : f32
    %10 = vector.broadcast %cst_7 : f32 to vector<16x1xf32>
    %11 = arith.mulf %9, %10 : vector<16x1xf32>
    %12 = arith.mulf %6, %6 : vector<16x1xf32>
    %13 = arith.subf %11, %12 : vector<16x1xf32>
    %cst_8 = arith.constant 0.000000e+00 : f32
    %14 = vector.broadcast %cst_8 : f32 to vector<16x1xf32>
    %15 = arith.maximumf %13, %14 : vector<16x1xf32>
    %16 = vector.broadcast %6 : vector<16x1xf32> to vector<16x128xf32>
    %17 = arith.subf %0, %16 : vector<16x128xf32>
    %cst_9 = arith.constant 9.99999974E-6 : f32
    %18 = vector.broadcast %cst_9 : f32 to vector<16x1xf32>
    %19 = arith.addf %15, %18 : vector<16x1xf32>
    %20 = math.rsqrt %19 : vector<16x1xf32>
    %21 = vector.broadcast %20 : vector<16x1xf32> to vector<16x128xf32>
    %22 = arith.mulf %17, %21 : vector<16x128xf32>
    %23 = vector.broadcast %1 : vector<1x128xf32> to vector<16x128xf32>
    %24 = arith.mulf %22, %23 : vector<16x128xf32>
    %25 = vector.broadcast %2 : vector<1x128xf32> to vector<16x128xf32>
    %26 = arith.addf %24, %25 : vector<16x128xf32>
    %27 = arith.mulf %26, %26 : vector<16x128xf32>
    %28 = arith.mulf %26, %27 : vector<16x128xf32>
    %cst_10 = arith.constant 4.471500e-02 : f32
    %29 = vector.broadcast %cst_10 : f32 to vector<16x128xf32>
    %30 = arith.mulf %29, %28 : vector<16x128xf32>
    %31 = arith.addf %26, %30 : vector<16x128xf32>
    %cst_11 = arith.constant 0.797884583 : f32
    %32 = vector.broadcast %cst_11 : f32 to vector<16x128xf32>
    %33 = arith.mulf %32, %31 : vector<16x128xf32>
    %34 = math.tanh %33 : vector<16x128xf32>
    %cst_12 = arith.constant 1.000000e+00 : f32
    %35 = vector.broadcast %cst_12 : f32 to vector<16x128xf32>
    %36 = arith.addf %35, %34 : vector<16x128xf32>
    %cst_13 = arith.constant 5.000000e-01 : f32
    %37 = vector.broadcast %cst_13 : f32 to vector<16x128xf32>
    %38 = arith.mulf %37, %36 : vector<16x128xf32>
    %39 = arith.mulf %26, %38 : vector<16x128xf32>
    %40 = arith.truncf %39 : vector<16x128xf32> to vector<16x128xbf16>
    %c0_14 = arith.constant 0 : index
    %c0_15 = arith.constant 0 : index
    %41 = vector.load %arg4[%c0_14, %c0_15] : memref<128x128xbf16, #tpu.memory_space<vmem>>, vector<128x128xbf16>
    %cst_16 = arith.constant dense<0.000000e+00> : vector<16x128xf32>
    %42 = tpu.matmul %40, %41, %cst_16 {dimension_numbers = #tpu.dot_dimension_numbers<[1], [0], [0], [1], [0, 0, 1, 1], [], []>} : vector<16x128xbf16>, vector<128x128xbf16>, vector<16x128xf32> -> vector<16x128xf32>
    %c0_17 = arith.constant 0 : index
    %c0_18 = arith.constant 0 : index
    %43 = vector.load %arg5[%c0_17, %c0_18] : memref<1x128xf32, #tpu.memory_space<vmem>>, vector<1x128xf32>
    %44 = vector.broadcast %43 : vector<1x128xf32> to vector<16x128xf32>
    %45 = arith.addf %42, %44 : vector<16x128xf32>
    %c0_19 = arith.constant 0 : index
    %c0_20 = arith.constant 0 : index
    %c0_21 = arith.constant 0 : index
    %46 = vector.load %arg6[%c0_19, %c0_20, %c0_21] : memref<2x1x128xf32, #tpu.memory_space<vmem>>, vector<1x1x128xf32>
    %47 = vector.shape_cast %46 : vector<1x1x128xf32> to vector<1x128xf32>
    %c0_22 = arith.constant 0 : index
    %c0_23 = arith.constant 0 : index
    %c0_24 = arith.constant 0 : index
    %48 = vector.load %arg7[%c0_22, %c0_23, %c0_24] : memref<2x1x128xf32, #tpu.memory_space<vmem>>, vector<1x1x128xf32>
    %49 = vector.shape_cast %48 : vector<1x1x128xf32> to vector<1x128xf32>
    %cst_25 = arith.constant dense<0.000000e+00> : vector<16xf32>
    %50 = vector.multi_reduction <add>, %45, %cst_25 [1] : vector<16x128xf32> to vector<16xf32>
    %51 = vector.shape_cast %50 : vector<16xf32> to vector<16x1xf32>
    %cst_26 = arith.constant 1.562500e-02 : f32
    %52 = vector.broadcast %cst_26 : f32 to vector<16x1xf32>
    %53 = arith.mulf %51, %52 : vector<16x1xf32>
    %54 = arith.mulf %45, %45 : vector<16x128xf32>
    %cst_27 = arith.constant dense<0.000000e+00> : vector<16xf32>
    %55 = vector.multi_reduction <add>, %54, %cst_27 [1] : vector<16x128xf32> to vector<16xf32>
    %56 = vector.shape_cast %55 : vector<16xf32> to vector<16x1xf32>
    %cst_28 = arith.constant 1.562500e-02 : f32
    %57 = vector.broadcast %cst_28 : f32 to vector<16x1xf32>
    %58 = arith.mulf %56, %57 : vector<16x1xf32>
    %59 = arith.mulf %53, %53 : vector<16x1xf32>
    %60 = arith.subf %58, %59 : vector<16x1xf32>
    %cst_29 = arith.constant 0.000000e+00 : f32
    %61 = vector.broadcast %cst_29 : f32 to vector<16x1xf32>
    %62 = arith.maximumf %60, %61 : vector<16x1xf32>
    %63 = vector.broadcast %53 : vector<16x1xf32> to vector<16x128xf32>
    %64 = arith.subf %45, %63 : vector<16x128xf32>
    %cst_30 = arith.constant 9.99999974E-6 : f32
    %65 = vector.broadcast %cst_30 : f32 to vector<16x1xf32>
    %66 = arith.addf %62, %65 : vector<16x1xf32>
    %67 = math.rsqrt %66 : vector<16x1xf32>
    %68 = vector.broadcast %67 : vector<16x1xf32> to vector<16x128xf32>
    %69 = arith.mulf %64, %68 : vector<16x128xf32>
    %70 = vector.broadcast %47 : vector<1x128xf32> to vector<16x128xf32>
    %71 = arith.mulf %69, %70 : vector<16x128xf32>
    %72 = vector.broadcast %49 : vector<1x128xf32> to vector<16x128xf32>
    %73 = arith.addf %71, %72 : vector<16x128xf32>
    %74 = arith.mulf %73, %73 : vector<16x128xf32>
    %75 = arith.mulf %73, %74 : vector<16x128xf32>
    %cst_31 = arith.constant 4.471500e-02 : f32
    %76 = vector.broadcast %cst_31 : f32 to vector<16x128xf32>
    %77 = arith.mulf %76, %75 : vector<16x128xf32>
    %78 = arith.addf %73, %77 : vector<16x128xf32>
    %cst_32 = arith.constant 0.797884583 : f32
    %79 = vector.broadcast %cst_32 : f32 to vector<16x128xf32>
    %80 = arith.mulf %79, %78 : vector<16x128xf32>
    %81 = math.tanh %80 : vector<16x128xf32>
    %cst_33 = arith.constant 1.000000e+00 : f32
    %82 = vector.broadcast %cst_33 : f32 to vector<16x128xf32>
    %83 = arith.addf %82, %81 : vector<16x128xf32>
    %cst_34 = arith.constant 5.000000e-01 : f32
    %84 = vector.broadcast %cst_34 : f32 to vector<16x128xf32>
    %85 = arith.mulf %84, %83 : vector<16x128xf32>
    %86 = arith.mulf %73, %85 : vector<16x128xf32>
    %87 = arith.truncf %86 : vector<16x128xf32> to vector<16x128xbf16>
    %c0_35 = arith.constant 0 : index
    %c0_36 = arith.constant 0 : index
    %c0_37 = arith.constant 0 : index
    %88 = vector.load %arg8[%c0_35, %c0_36, %c0_37] : memref<2x128x128xbf16, #tpu.memory_space<vmem>>, vector<1x128x128xbf16>
    %89 = vector.shape_cast %88 : vector<1x128x128xbf16> to vector<128x128xbf16>
    %cst_38 = arith.constant dense<0.000000e+00> : vector<16x128xf32>
    %90 = tpu.matmul %87, %89, %cst_38 {dimension_numbers = #tpu.dot_dimension_numbers<[1], [0], [0], [1], [0, 0, 1, 1], [], []>} : vector<16x128xbf16>, vector<128x128xbf16>, vector<16x128xf32> -> vector<16x128xf32>
    %c0_39 = arith.constant 0 : index
    %c0_40 = arith.constant 0 : index
    %c0_41 = arith.constant 0 : index
    %91 = vector.load %arg9[%c0_39, %c0_40, %c0_41] : memref<2x1x128xf32, #tpu.memory_space<vmem>>, vector<1x1x128xf32>
    %92 = vector.shape_cast %91 : vector<1x1x128xf32> to vector<1x128xf32>
    %93 = vector.broadcast %92 : vector<1x128xf32> to vector<16x128xf32>
    %94 = arith.addf %90, %93 : vector<16x128xf32>
    %95 = arith.addf %45, %94 : vector<16x128xf32>
    %c1 = arith.constant 1 : index
    %c0_42 = arith.constant 0 : index
    %c0_43 = arith.constant 0 : index
    %96 = vector.load %arg6[%c1, %c0_42, %c0_43] : memref<2x1x128xf32, #tpu.memory_space<vmem>>, vector<1x1x128xf32>
    %97 = vector.shape_cast %96 : vector<1x1x128xf32> to vector<1x128xf32>
    %c1_44 = arith.constant 1 : index
    %c0_45 = arith.constant 0 : index
    %c0_46 = arith.constant 0 : index
    %98 = vector.load %arg7[%c1_44, %c0_45, %c0_46] : memref<2x1x128xf32, #tpu.memory_space<vmem>>, vector<1x1x128xf32>
    %99 = vector.shape_cast %98 : vector<1x1x128xf32> to vector<1x128xf32>
    %cst_47 = arith.constant dense<0.000000e+00> : vector<16xf32>
    %100 = vector.multi_reduction <add>, %95, %cst_47 [1] : vector<16x128xf32> to vector<16xf32>
    %101 = vector.shape_cast %100 : vector<16xf32> to vector<16x1xf32>
    %cst_48 = arith.constant 1.562500e-02 : f32
    %102 = vector.broadcast %cst_48 : f32 to vector<16x1xf32>
    %103 = arith.mulf %101, %102 : vector<16x1xf32>
    %104 = arith.mulf %95, %95 : vector<16x128xf32>
    %cst_49 = arith.constant dense<0.000000e+00> : vector<16xf32>
    %105 = vector.multi_reduction <add>, %104, %cst_49 [1] : vector<16x128xf32> to vector<16xf32>
    %106 = vector.shape_cast %105 : vector<16xf32> to vector<16x1xf32>
    %cst_50 = arith.constant 1.562500e-02 : f32
    %107 = vector.broadcast %cst_50 : f32 to vector<16x1xf32>
    %108 = arith.mulf %106, %107 : vector<16x1xf32>
    %109 = arith.mulf %103, %103 : vector<16x1xf32>
    %110 = arith.subf %108, %109 : vector<16x1xf32>
    %cst_51 = arith.constant 0.000000e+00 : f32
    %111 = vector.broadcast %cst_51 : f32 to vector<16x1xf32>
    %112 = arith.maximumf %110, %111 : vector<16x1xf32>
    %113 = vector.broadcast %103 : vector<16x1xf32> to vector<16x128xf32>
    %114 = arith.subf %95, %113 : vector<16x128xf32>
    %cst_52 = arith.constant 9.99999974E-6 : f32
    %115 = vector.broadcast %cst_52 : f32 to vector<16x1xf32>
    %116 = arith.addf %112, %115 : vector<16x1xf32>
    %117 = math.rsqrt %116 : vector<16x1xf32>
    %118 = vector.broadcast %117 : vector<16x1xf32> to vector<16x128xf32>
    %119 = arith.mulf %114, %118 : vector<16x128xf32>
    %120 = vector.broadcast %97 : vector<1x128xf32> to vector<16x128xf32>
    %121 = arith.mulf %119, %120 : vector<16x128xf32>
    %122 = vector.broadcast %99 : vector<1x128xf32> to vector<16x128xf32>
    %123 = arith.addf %121, %122 : vector<16x128xf32>
    %124 = arith.mulf %123, %123 : vector<16x128xf32>
    %125 = arith.mulf %123, %124 : vector<16x128xf32>
    %cst_53 = arith.constant 4.471500e-02 : f32
    %126 = vector.broadcast %cst_53 : f32 to vector<16x128xf32>
    %127 = arith.mulf %126, %125 : vector<16x128xf32>
    %128 = arith.addf %123, %127 : vector<16x128xf32>
    %cst_54 = arith.constant 0.797884583 : f32
    %129 = vector.broadcast %cst_54 : f32 to vector<16x128xf32>
    %130 = arith.mulf %129, %128 : vector<16x128xf32>
    %131 = math.tanh %130 : vector<16x128xf32>
    %cst_55 = arith.constant 1.000000e+00 : f32
    %132 = vector.broadcast %cst_55 : f32 to vector<16x128xf32>
    %133 = arith.addf %132, %131 : vector<16x128xf32>
    %cst_56 = arith.constant 5.000000e-01 : f32
    %134 = vector.broadcast %cst_56 : f32 to vector<16x128xf32>
    %135 = arith.mulf %134, %133 : vector<16x128xf32>
    %136 = arith.mulf %123, %135 : vector<16x128xf32>
    %137 = arith.truncf %136 : vector<16x128xf32> to vector<16x128xbf16>
    %c1_57 = arith.constant 1 : index
    %c0_58 = arith.constant 0 : index
    %c0_59 = arith.constant 0 : index
    %138 = vector.load %arg8[%c1_57, %c0_58, %c0_59] : memref<2x128x128xbf16, #tpu.memory_space<vmem>>, vector<1x128x128xbf16>
    %139 = vector.shape_cast %138 : vector<1x128x128xbf16> to vector<128x128xbf16>
    %cst_60 = arith.constant dense<0.000000e+00> : vector<16x128xf32>
    %140 = tpu.matmul %137, %139, %cst_60 {dimension_numbers = #tpu.dot_dimension_numbers<[1], [0], [0], [1], [0, 0, 1, 1], [], []>} : vector<16x128xbf16>, vector<128x128xbf16>, vector<16x128xf32> -> vector<16x128xf32>
    %c1_61 = arith.constant 1 : index
    %c0_62 = arith.constant 0 : index
    %c0_63 = arith.constant 0 : index
    %141 = vector.load %arg9[%c1_61, %c0_62, %c0_63] : memref<2x1x128xf32, #tpu.memory_space<vmem>>, vector<1x1x128xf32>
    %142 = vector.shape_cast %141 : vector<1x1x128xf32> to vector<1x128xf32>
    %143 = vector.broadcast %142 : vector<1x128xf32> to vector<16x128xf32>
    %144 = arith.addf %140, %143 : vector<16x128xf32>
    %145 = arith.addf %95, %144 : vector<16x128xf32>
    %c0_64 = arith.constant 0 : index
    %c0_65 = arith.constant 0 : index
    %146 = vector.load %arg10[%c0_64, %c0_65] : memref<1x128xf32, #tpu.memory_space<vmem>>, vector<1x128xf32>
    %c0_66 = arith.constant 0 : index
    %c0_67 = arith.constant 0 : index
    %147 = vector.load %arg11[%c0_66, %c0_67] : memref<1x128xf32, #tpu.memory_space<vmem>>, vector<1x128xf32>
    %cst_68 = arith.constant dense<0.000000e+00> : vector<16xf32>
    %148 = vector.multi_reduction <add>, %145, %cst_68 [1] : vector<16x128xf32> to vector<16xf32>
    %149 = vector.shape_cast %148 : vector<16xf32> to vector<16x1xf32>
    %cst_69 = arith.constant 1.562500e-02 : f32
    %150 = vector.broadcast %cst_69 : f32 to vector<16x1xf32>
    %151 = arith.mulf %149, %150 : vector<16x1xf32>
    %152 = arith.mulf %145, %145 : vector<16x128xf32>
    %cst_70 = arith.constant dense<0.000000e+00> : vector<16xf32>
    %153 = vector.multi_reduction <add>, %152, %cst_70 [1] : vector<16x128xf32> to vector<16xf32>
    %154 = vector.shape_cast %153 : vector<16xf32> to vector<16x1xf32>
    %cst_71 = arith.constant 1.562500e-02 : f32
    %155 = vector.broadcast %cst_71 : f32 to vector<16x1xf32>
    %156 = arith.mulf %154, %155 : vector<16x1xf32>
    %157 = arith.mulf %151, %151 : vector<16x1xf32>
    %158 = arith.subf %156, %157 : vector<16x1xf32>
    %cst_72 = arith.constant 0.000000e+00 : f32
    %159 = vector.broadcast %cst_72 : f32 to vector<16x1xf32>
    %160 = arith.maximumf %158, %159 : vector<16x1xf32>
    %161 = vector.broadcast %151 : vector<16x1xf32> to vector<16x128xf32>
    %162 = arith.subf %145, %161 : vector<16x128xf32>
    %cst_73 = arith.constant 9.99999974E-6 : f32
    %163 = vector.broadcast %cst_73 : f32 to vector<16x1xf32>
    %164 = arith.addf %160, %163 : vector<16x1xf32>
    %165 = math.rsqrt %164 : vector<16x1xf32>
    %166 = vector.broadcast %165 : vector<16x1xf32> to vector<16x128xf32>
    %167 = arith.mulf %162, %166 : vector<16x128xf32>
    %168 = vector.broadcast %146 : vector<1x128xf32> to vector<16x128xf32>
    %169 = arith.mulf %167, %168 : vector<16x128xf32>
    %170 = vector.broadcast %147 : vector<1x128xf32> to vector<16x128xf32>
    %171 = arith.addf %169, %170 : vector<16x128xf32>
    %172 = arith.mulf %171, %171 : vector<16x128xf32>
    %173 = arith.mulf %171, %172 : vector<16x128xf32>
    %cst_74 = arith.constant 4.471500e-02 : f32
    %174 = vector.broadcast %cst_74 : f32 to vector<16x128xf32>
    %175 = arith.mulf %174, %173 : vector<16x128xf32>
    %176 = arith.addf %171, %175 : vector<16x128xf32>
    %cst_75 = arith.constant 0.797884583 : f32
    %177 = vector.broadcast %cst_75 : f32 to vector<16x128xf32>
    %178 = arith.mulf %177, %176 : vector<16x128xf32>
    %179 = math.tanh %178 : vector<16x128xf32>
    %cst_76 = arith.constant 1.000000e+00 : f32
    %180 = vector.broadcast %cst_76 : f32 to vector<16x128xf32>
    %181 = arith.addf %180, %179 : vector<16x128xf32>
    %cst_77 = arith.constant 5.000000e-01 : f32
    %182 = vector.broadcast %cst_77 : f32 to vector<16x128xf32>
    %183 = arith.mulf %182, %181 : vector<16x128xf32>
    %184 = arith.mulf %171, %183 : vector<16x128xf32>
    %185 = arith.truncf %184 : vector<16x128xf32> to vector<16x128xbf16>
    %c0_78 = arith.constant 0 : index
    %c0_79 = arith.constant 0 : index
    %186 = vector.load %arg12[%c0_78, %c0_79] : memref<128x128xbf16, #tpu.memory_space<vmem>>, vector<128x128xbf16>
    %cst_80 = arith.constant dense<0.000000e+00> : vector<16x128xf32>
    %187 = tpu.matmul %185, %186, %cst_80 {dimension_numbers = #tpu.dot_dimension_numbers<[1], [0], [0], [1], [0, 0, 1, 1], [], []>} : vector<16x128xbf16>, vector<128x128xbf16>, vector<16x128xf32> -> vector<16x128xf32>
    %c0_81 = arith.constant 0 : index
    %c0_82 = arith.constant 0 : index
    %188 = vector.load %arg13[%c0_81, %c0_82] : memref<1x128xf32, #tpu.memory_space<vmem>>, vector<1x128xf32>
    %189 = vector.broadcast %188 : vector<1x128xf32> to vector<16x128xf32>
    %190 = arith.addf %187, %189 : vector<16x128xf32>
    %c0_83 = arith.constant 0 : index
    %c0_84 = arith.constant 0 : index
    %191 = vector.load %arg14[%c0_83, %c0_84] : memref<16x128xf32, #tpu.memory_space<vmem>>, vector<16x128xf32>
    tpu.vector_store %arg14[%c0_83, %c0_84], %190 {strides = array<i32>} : memref<16x128xf32, #tpu.memory_space<vmem>>, vector<16x128xf32>,
    return
  }
  func.func @transform_0(%arg0: i32) -> (i32, i32) {
    %c0_i32 = arith.constant 0 : i32
    %c0_i32_0 = arith.constant 0 : i32
    return %arg0, %c0_i32 : i32, i32
  }
  func.func @transform_1(%arg0: i32) -> (i32, i32) {
    %c0_i32 = arith.constant 0 : i32
    %c0_i32_0 = arith.constant 0 : i32
    %c0_i32_1 = arith.constant 0 : i32
    return %c0_i32, %c0_i32_0 : i32, i32
  }
  func.func @transform_2(%arg0: i32) -> (i32, i32) {
    %c0_i32 = arith.constant 0 : i32
    %c0_i32_0 = arith.constant 0 : i32
    %c0_i32_1 = arith.constant 0 : i32
    return %c0_i32, %c0_i32_0 : i32, i32
  }
  func.func @transform_3(%arg0: i32) -> (i32, i32) {
    %c0_i32 = arith.constant 0 : i32
    %c0_i32_0 = arith.constant 0 : i32
    %c0_i32_1 = arith.constant 0 : i32
    return %c0_i32, %c0_i32_0 : i32, i32
  }
  func.func @transform_4(%arg0: i32) -> (i32, i32) {
    %c0_i32 = arith.constant 0 : i32
    %c0_i32_0 = arith.constant 0 : i32
    %c0_i32_1 = arith.constant 0 : i32
    return %c0_i32, %c0_i32_0 : i32, i32
  }
  func.func @transform_5(%arg0: i32) -> (i32, i32, i32) {
    %c0_i32 = arith.constant 0 : i32
    %c0_i32_0 = arith.constant 0 : i32
    %c0_i32_1 = arith.constant 0 : i32
    %c0_i32_2 = arith.constant 0 : i32
    return %c0_i32, %c0_i32_0, %c0_i32_1 : i32, i32, i32
  }
  func.func @transform_6(%arg0: i32) -> (i32, i32, i32) {
    %c0_i32 = arith.constant 0 : i32
    %c0_i32_0 = arith.constant 0 : i32
    %c0_i32_1 = arith.constant 0 : i32
    %c0_i32_2 = arith.constant 0 : i32
    return %c0_i32, %c0_i32_0, %c0_i32_1 : i32, i32, i32
  }
  func.func @transform_7(%arg0: i32) -> (i32, i32, i32) {
    %c0_i32 = arith.constant 0 : i32
    %c0_i32_0 = arith.constant 0 : i32
    %c0_i32_1 = arith.constant 0 : i32
    %c0_i32_2 = arith.constant 0 : i32
    return %c0_i32, %c0_i32_0, %c0_i32_1 : i32, i32, i32
  }
  func.func @transform_8(%arg0: i32) -> (i32, i32, i32) {
    %c0_i32 = arith.constant 0 : i32
    %c0_i32_0 = arith.constant 0 : i32
    %c0_i32_1 = arith.constant 0 : i32
    %c0_i32_2 = arith.constant 0 : i32
    return %c0_i32, %c0_i32_0, %c0_i32_1 : i32, i32, i32
  }
  func.func @transform_9(%arg0: i32) -> (i32, i32) {
    %c0_i32 = arith.constant 0 : i32
    %c0_i32_0 = arith.constant 0 : i32
    %c0_i32_1 = arith.constant 0 : i32
    return %c0_i32, %c0_i32_0 : i32, i32
  }
  func.func @transform_10(%arg0: i32) -> (i32, i32) {
    %c0_i32 = arith.constant 0 : i32
    %c0_i32_0 = arith.constant 0 : i32
    %c0_i32_1 = arith.constant 0 : i32
    return %c0_i32, %c0_i32_0 : i32, i32
  }
  func.func @transform_11(%arg0: i32) -> (i32, i32) {
    %c0_i32 = arith.constant 0 : i32
    %c0_i32_0 = arith.constant 0 : i32
    %c0_i32_1 = arith.constant 0 : i32
    return %c0_i32, %c0_i32_0 : i32, i32
  }
  func.func @transform_12(%arg0: i32) -> (i32, i32) {
    %c0_i32 = arith.constant 0 : i32
    %c0_i32_0 = arith.constant 0 : i32
    %c0_i32_1 = arith.constant 0 : i32
    return %c0_i32, %c0_i32_0 : i32, i32
  }
  func.func @transform_13(%arg0: i32) -> (i32, i32) {
    %c0_i32 = arith.constant 0 : i32
    %c0_i32_0 = arith.constant 0 : i32
    return %arg0, %c0_i32 : i32, i32
  }
}

</mosaic_0001>

<llo_original>
// kernel: tpu_custom_call.1
$region0: #{tpu_custom_call.1}
  #allocation0 [shape = 'u32[]', space=smem, size = 0x4, offset = 0x4, fixed_abs, tag = 'smem constant byte address 0x4 - core index']
  #allocation1 [shape = 'u32[144,128]{1,0:T(1,128)}', space=vmem, size = 0x12000, scoped, tag = 'internal scratch']
  %s0 = inlined_call_operand.hbm [shape: f32[16,128], index: 0, kind: input, shape index: {}]
  %s1 = inlined_call_operand.vmem [shape: f32[1,128], index: 1, kind: input, shape index: {}]
  %s2 = inlined_call_operand.hbm [shape: f32[1,128], index: 2, kind: input, shape index: {}]
  %s3 = inlined_call_operand.hbm [shape: bf16[128,128], index: 3, kind: input, shape index: {}]
  %s4 = inlined_call_operand.vmem [shape: f32[1,128], index: 4, kind: input, shape index: {}]
  %s5 = inlined_call_operand.vmem [shape: f32[2,1,128], index: 5, kind: input, shape index: {}]
  %s6 = inlined_call_operand.vmem [shape: f32[2,1,128], index: 6, kind: input, shape index: {}]
  %s7 = inlined_call_operand.hbm [shape: bf16[2,128,128], index: 7, kind: input, shape index: {}]
  %s8 = inlined_call_operand.vmem [shape: f32[2,1,128], index: 8, kind: input, shape index: {}]
  %s9 = inlined_call_operand.vmem [shape: f32[1,128], index: 9, kind: input, shape index: {}]
  %s10 = inlined_call_operand.vmem [shape: f32[1,128], index: 10, kind: input, shape index: {}]
  %s11 = inlined_call_operand.hbm [shape: bf16[128,128], index: 11, kind: input, shape index: {}]
  %s12 = inlined_call_operand.vmem [shape: f32[1,128], index: 12, kind: input, shape index: {}]
  %s13 = inlined_call_operand.hbm [shape: f32[16,128], index: 13, kind: output, shape index: {}]
  %s14 = sld [smem:[#allocation0]]
  $region82: #{tpu_custom_call.1} parent=0
    _
  %s16 = ssub.s32 1, %s14
  %s17 = scalar_select 0, %s16, %s14
  $region1: #{tpu_custom_call.1} parent=0
    #allocation2 [shape = 'u8[8192]{0}', space=vmem, size = 0x2000, scoped, tag = 'input window, operand 0, single buffered']
    #allocation3 [shape = 's32[1]{0}', space=sflag, size = 0x4, scoped, tag = 'scoped memory for tpu_custom_call.1']
    #allocation4 [shape = 's32[1]{0}', space=sflag, size = 0x4, scoped, tag = 'scoped memory for tpu_custom_call.1']
    #allocation5 [shape = 'u8[512]{0}', space=vmem, size = 0x400, scoped, tag = 'input window, operand 2, single buffered']
    #allocation6 [shape = 's32[1]{0}', space=sflag, size = 0x4, scoped, tag = 'scoped memory for tpu_custom_call.1']
    #allocation7 [shape = 'u8[32768]{0}', space=vmem, size = 0x8000, scoped, tag = 'input window, operand 3, single buffered']
    #allocation8 [shape = 'u8[65536]{0}', space=vmem, size = 0x10000, scoped, tag = 'input window, operand 7, single buffered']
    #allocation9 [shape = 's32[1]{0}', space=sflag, size = 0x4, scoped, tag = 'scoped memory for tpu_custom_call.1']
    #allocation10 [shape = 'u8[32768]{0}', space=vmem, size = 0x8000, scoped, tag = 'input window, operand 11, single buffered']
    #allocation11 [shape = 'u8[8192]{0}', space=vmem, size = 0x2000, scoped, tag = 'output window, operand 0, single buffered']
    %18 = vsyncpa [#allocation3], 0
    %19 = vsyncpa [#allocation6], 0
    %20 = vsyncpa [#allocation9], 0
    %21 = vsyncpa [#allocation4], 0
    // Predicated region
    $region2: #{tpu_custom_call.1} parent=1 // pred_check
      _
    $region3: #{tpu_custom_call.1} parent=1 // pred_check_branch
      %23 = sbr.rel (0) target = $region5
    $region4: #{tpu_custom_call.1} parent=1 // pred_region
      %s25 = ssub.s32 256, 256
      %26 = vsyncadd [#allocation3], %s25
      %s27 = sshll.u32 [#allocation2], 4
      %s28 = int_to_ptr.vmem [resolvable:$true] %s27
      %33 = dma.hbm_to_vmem [thread:$0]  %s0, 256, %s28, [#allocation3], 128, 128, 8
    $region5: #{tpu_custom_call.1} parent=1 // pred_fallthru
      _
    // Predicated region
    $region6: #{tpu_custom_call.1} parent=1 // pred_check
      _
    $region7: #{tpu_custom_call.1} parent=1 // pred_check_branch
      %35 = sbr.rel (0) target = $region9
    $region8: #{tpu_custom_call.1} parent=1 // pred_region
      _
    $region9: #{tpu_custom_call.1} parent=1 // pred_fallthru
      _
    // Predicated region
    $region10: #{tpu_custom_call.1} parent=1 // pred_check
      _
    $region11: #{tpu_custom_call.1} parent=1 // pred_check_branch
      %37 = sbr.rel (0) target = $region13
    $region12: #{tpu_custom_call.1} parent=1 // pred_region
      %s39 = ssub.s32 16, 16
      %40 = vsyncadd [#allocation6], %s39
      %s42 = sshll.u32 [#allocation5], 4
      %s43 = int_to_ptr.vmem [resolvable:$true] %s42
      %45 = dma.hbm_to_vmem [thread:$0]  %s2, 16, %s43, [#allocation6]
    $region13: #{tpu_custom_call.1} parent=1 // pred_fallthru
      _
    // Predicated region
    $region14: #{tpu_custom_call.1} parent=1 // pred_check
      _
    $region15: #{tpu_custom_call.1} parent=1 // pred_check_branch
      %47 = sbr.rel (0) target = $region17
    $region16: #{tpu_custom_call.1} parent=1 // pred_region
      %s49 = ssub.s32 1024, 1024
      %50 = vsyncadd [#allocation6], %s49
      %s51 = sshll.u32 [#allocation7], 4
      %s52 = int_to_ptr.vmem [resolvable:$true] %s51
      %57 = dma.hbm_to_vmem [thread:$0]  %s3, 1024, %s52, [#allocation6], 64, 64, 4
    $region17: #{tpu_custom_call.1} parent=1 // pred_fallthru
      _
    // Predicated region
    $region18: #{tpu_custom_call.1} parent=1 // pred_check
      _
    $region19: #{tpu_custom_call.1} parent=1 // pred_check_branch
      %59 = sbr.rel (0) target = $region21
    $region20: #{tpu_custom_call.1} parent=1 // pred_region
      _
    $region21: #{tpu_custom_call.1} parent=1 // pred_fallthru
      _
    // Predicated region
    $region22: #{tpu_custom_call.1} parent=1 // pred_check
      _
    $region23: #{tpu_custom_call.1} parent=1 // pred_check_branch
      %61 = sbr.rel (0) target = $region25
    $region24: #{tpu_custom_call.1} parent=1 // pred_region
      _
    $region25: #{tpu_custom_call.1} parent=1 // pred_fallthru
      _
    // Predicated region
    $region26: #{tpu_custom_call.1} parent=1 // pred_check
      _
    $region27: #{tpu_custom_call.1} parent=1 // pred_check_branch
      %63 = sbr.rel (0) target = $region29
    $region28: #{tpu_custom_call.1} parent=1 // pred_region
      _
    $region29: #{tpu_custom_call.1} parent=1 // pred_fallthru
      _
    // Predicated region
    $region30: #{tpu_custom_call.1} parent=1 // pred_check
      _
    $region31: #{tpu_custom_call.1} parent=1 // pred_check_branch
      %65 = sbr.rel (0) target = $region33
    $region32: #{tpu_custom_call.1} parent=1 // pred_region
      %s67 = ssub.s32 2048, 2048
      %68 = vsyncadd [#allocation9], %s67
      %s69 = sshll.u32 [#allocation8], 4
      %s70 = int_to_ptr.vmem [resolvable:$true] %s69
      %75 = dma.hbm_to_vmem [thread:$0]  %s7, 2048, %s70, [#allocation9], 64, 64, 4
    $region33: #{tpu_custom_call.1} parent=1 // pred_fallthru
      _
    // Predicated region
    $region34: #{tpu_custom_call.1} parent=1 // pred_check
      _
    $region35: #{tpu_custom_call.1} parent=1 // pred_check_branch
      %77 = sbr.rel (0) target = $region37
    $region36: #{tpu_custom_call.1} parent=1 // pred_region
      _
    $region37: #{tpu_custom_call.1} parent=1 // pred_fallthru
      _
    // Predicated region
    $region38: #{tpu_custom_call.1} parent=1 // pred_check
      _
    $region39: #{tpu_custom_call.1} parent=1 // pred_check_branch
      %79 = sbr.rel (0) target = $region41
    $region40: #{tpu_custom_call.1} parent=1 // pred_region
      _
    $region41: #{tpu_custom_call.1} parent=1 // pred_fallthru
      _
    // Predicated region
    $region42: #{tpu_custom_call.1} parent=1 // pred_check
      _
    $region43: #{tpu_custom_call.1} parent=1 // pred_check_branch
      %81 = sbr.rel (0) target = $region45
    $region44: #{tpu_custom_call.1} parent=1 // pred_region
      _
    $region45: #{tpu_custom_call.1} parent=1 // pred_fallthru
      _
    // Predicated region
    $region46: #{tpu_custom_call.1} parent=1 // pred_check
      _
    $region47: #{tpu_custom_call.1} parent=1 // pred_check_branch
      %83 = sbr.rel (0) target = $region49
    $region48: #{tpu_custom_call.1} parent=1 // pred_region
      %s85 = ssub.s32 1024, 1024
      %86 = vsyncadd [#allocation9], %s85
      %s87 = sshll.u32 [#allocation10], 4
      %s88 = int_to_ptr.vmem [resolvable:$true] %s87
      %93 = dma.hbm_to_vmem [thread:$0]  %s11, 1024, %s88, [#allocation9], 64, 64, 4
    $region49: #{tpu_custom_call.1} parent=1 // pred_fallthru
      _
    // Predicated region
    $region50: #{tpu_custom_call.1} parent=1 // pred_check
      _
    $region51: #{tpu_custom_call.1} parent=1 // pred_check_branch
      %95 = sbr.rel (0) target = $region53
    $region52: #{tpu_custom_call.1} parent=1 // pred_region
      _
    $region53: #{tpu_custom_call.1} parent=1 // pred_fallthru
      _
    // Predicated region
    $region54: #{tpu_custom_call.1} parent=1 // pred_check
      _
    $region55: #{tpu_custom_call.1} parent=1 // pred_check_branch
      %97 = sbr.rel (0) target = $region57
    $region56: #{tpu_custom_call.1} parent=1 // pred_region
      %98 = dma.done [#allocation3], 256
    $region57: #{tpu_custom_call.1} parent=1 // pred_fallthru
      _
    // Predicated region
    $region58: #{tpu_custom_call.1} parent=1 // pred_check
      _
    $region59: #{tpu_custom_call.1} parent=1 // pred_check_branch
      %100 = sbr.rel (0) target = $region61
    $region60: #{tpu_custom_call.1} parent=1 // pred_region
      %101 = dma.done [#allocation6], 16
    $region61: #{tpu_custom_call.1} parent=1 // pred_fallthru
      _
    // Predicated region
    $region62: #{tpu_custom_call.1} parent=1 // pred_check
      _
    $region63: #{tpu_custom_call.1} parent=1 // pred_check_branch
      %103 = sbr.rel (0) target = $region65
    $region64: #{tpu_custom_call.1} parent=1 // pred_region
      %104 = dma.done [#allocation6], 1024
    $region65: #{tpu_custom_call.1} parent=1 // pred_fallthru
      _
    // Predicated region
    $region66: #{tpu_custom_call.1} parent=1 // pred_check
      _
    $region67: #{tpu_custom_call.1} parent=1 // pred_check_branch
      %106 = sbr.rel (0) target = $region69
    $region68: #{tpu_custom_call.1} parent=1 // pred_region
      %107 = dma.done [#allocation9], 2048
    $region69: #{tpu_custom_call.1} parent=1 // pred_fallthru
      _
    // Predicated region
    $region70: #{tpu_custom_call.1} parent=1 // pred_check
      _
    $region71: #{tpu_custom_call.1} parent=1 // pred_check_branch
      %109 = sbr.rel (0) target = $region73
    $region72: #{tpu_custom_call.1} parent=1 // pred_region
      %110 = dma.done [#allocation9], 1024
    $region73: #{tpu_custom_call.1} parent=1 // pred_fallthru
      _
    %v112 = vld [vmem:[#allocation2] sm:$0xff]
    %v113 = vld [vmem:[#allocation2 + $0x8] sm:$0xff]
    %v114 = vld [vmem:[%s1] sm:$0x1]
    %v115 = vld [vmem:[#allocation5] sm:$0x1]
    %116 = vadd.xlane.f32.xlu0 %v112
    %v117 = vpop.xlane.xlu0 %116
    %118 = vadd.xlane.f32.xlu0 %v113
    %v119 = vpop.xlane.xlu0 %118
    %v120 = vmul.f32 %v117, 0.03125
    %v121 = vmul.f32 %v119, 0.03125
    %v122 = vmul.f32 %v112, %v112
    %v123 = vmul.f32 %v113, %v113
    %124 = vadd.xlane.f32.xlu0 %v122
    %v125 = vpop.xlane.xlu0 %124
    %126 = vadd.xlane.f32.xlu0 %v123
    %v127 = vpop.xlane.xlu0 %126
    %v128 = vmul.f32 %v125, 0.03125
    %v129 = vmul.f32 %v127, 0.03125
    %v130 = vmul.f32 %v120, %v120
    %v131 = vmul.f32 %v121, %v121
    %v132 = vsub.f32 %v128, %v130
    %v133 = vsub.f32 %v129, %v131
    %v134 = vmax.f32 %v132, 0.0
    %v135 = vmax.f32 %v133, 0.0
    %v136 = vsub.f32 %v112, %v120
    %v137 = vsub.f32 %v113, %v121
    %v138 = vadd.f32 %v134, 1e-05
    %v139 = vadd.f32 %v135, 1e-05
    %v140 = vrsqrt.pop %v138
    %v141 = vrsqrt.pop %v139
    %v142 = vmul.f32 %v136, %v140
    %v143 = vmul.f32 %v137, %v141
    %v145 = vlaneseq
    %v146 = vshrl.u32 %v145, 7
    %v147 = vsub.s32 0, %v146
    %v148 = vrot.slane %v114, %v147
    %v150 = vmul.f32 %v142, %v148
    %v151 = vmul.f32 %v143, %v148
    %v153 = vlaneseq
    %v154 = vshrl.u32 %v153, 7
    %v155 = vsub.s32 0, %v154
    %v156 = vrot.slane %v115, %v155
    %v158 = vadd.f32 %v150, %v156
    %v159 = vadd.f32 %v151, %v156
    %v160 = vmul.f32 %v158, %v158
    %v161 = vmul.f32 %v159, %v159
    %v162 = vmul.f32 %v158, %v160
    %v163 = vmul.f32 %v159, %v161
    %v164 = vmul.f32 %v162, 0.044715
    %v165 = vmul.f32 %v163, 0.044715
    %v166 = vadd.f32 %v158, %v164
    %v167 = vadd.f32 %v159, %v165
    %v168 = vmul.f32 %v166, 0.7978846
    %v169 = vmul.f32 %v167, 0.7978846
    %v170 = vtanh.pop %v168
    %v171 = vtanh.pop %v169
    %v172 = vadd.f32 %v170, 1.0
    %v173 = vadd.f32 %v171, 1.0
    %v174 = vmul.f32 %v172, 0.5
    %v175 = vmul.f32 %v173, 0.5
    %v176 = vmul.f32 %v158, %v174
    %v177 = vmul.f32 %v159, %v175
    %v178 = vpack.c.bf16 %v177, %v176
    %v179 = vld [vmem:[#allocation7] sm:$0xf]
    %v180 = vld [vmem:[#allocation7 + $0x4] sm:$0xf]
    %v181 = vld [vmem:[#allocation7 + $0x8] sm:$0xf]
    %v182 = vld [vmem:[#allocation7 + $0xc] sm:$0xf]
    %v183 = vld [vmem:[#allocation7 + $0x10] sm:$0xf]
    %v184 = vld [vmem:[#allocation7 + $0x14] sm:$0xf]
    %v185 = vld [vmem:[#allocation7 + $0x18] sm:$0xf]
    %v186 = vld [vmem:[#allocation7 + $0x1c] sm:$0xf]
    %v187 = vld [vmem:[#allocation7 + $0x20] sm:$0xf]
    %v188 = vld [vmem:[#allocation7 + $0x24] sm:$0xf]
    %v189 = vld [vmem:[#allocation7 + $0x28] sm:$0xf]
    %v190 = vld [vmem:[#allocation7 + $0x2c] sm:$0xf]
    %v191 = vld [vmem:[#allocation7 + $0x30] sm:$0xf]
    %v192 = vld [vmem:[#allocation7 + $0x34] sm:$0xf]
    %v193 = vld [vmem:[#allocation7 + $0x38] sm:$0xf]
    %v194 = vld [vmem:[#allocation7 + $0x3c] sm:$0xf]
    %v195 = vld [vmem:[%s4] sm:$0x1]
    %v197 = vlaneseq
    %v198 = vshrl.u32 %v197, 7
    %v199 = vsub.s32 0, %v198
    %v200 = vrot.slane %v195, %v199
    %v218 = vunpack.c.l.b16 %v179
    %v219 = vunpack.c.l.b16 %v180
    %v220 = vunpack.c.l.b16 %v181
    %v221 = vunpack.c.l.b16 %v182
    %v222 = vunpack.c.l.b16 %v183
    %v223 = vunpack.c.l.b16 %v184
    %v224 = vunpack.c.l.b16 %v185
    %v225 = vunpack.c.l.b16 %v186
    %v226 = vunpack.c.l.b16 %v187
    %v227 = vunpack.c.l.b16 %v188
    %v228 = vunpack.c.l.b16 %v189
    %v229 = vunpack.c.l.b16 %v190
    %v230 = vunpack.c.l.b16 %v191
    %v231 = vunpack.c.l.b16 %v192
    %v232 = vunpack.c.l.b16 %v193
    %v233 = vunpack.c.l.b16 %v194
    %v234 = vpack.c.b16 %v219, %v218
    %v235 = vpack.c.b16 %v221, %v220
    %v236 = vpack.c.b16 %v223, %v222
    %v237 = vpack.c.b16 %v225, %v224
    %v238 = vpack.c.b16 %v227, %v226
    %v239 = vpack.c.b16 %v229, %v228
    %v240 = vpack.c.b16 %v231, %v230
    %v241 = vpack.c.b16 %v233, %v232
    %250 = vmatprep.subr.bf16.mxu0 0
    %251 = vmatpush1.bf16.msra.mxu0 %v234
    %252 = vmatprep.subr.bf16.mxu0 0
    %253 = vmatpush1.bf16.msra.mxu0 %v235
    %254 = vmatprep.subr.bf16.mxu0 0
    %255 = vmatpush1.bf16.msra.mxu0 %v236
    %256 = vmatprep.subr.bf16.mxu0 0
    %257 = vmatpush1.bf16.msra.mxu0 %v237
    %258 = vmatprep.subr.bf16.mxu0 0
    %259 = vmatpush1.bf16.msra.mxu0 %v238
    %260 = vmatprep.subr.bf16.mxu0 0
    %261 = vmatpush1.bf16.msra.mxu0 %v239
    %262 = vmatprep.subr.bf16.mxu0 0
    %263 = vmatpush1.bf16.msra.mxu0 %v240
    %264 = vmatprep.subr.bf16.mxu0 0
    %265 = vmatpush1.bf16.msra.mxu0 %v241
    %266 = vmatprep.subr.bf16.mxu0 0
    %267 = vmatpush1.bf16.msra.mxu0 0
    %268 = vmatprep.subr.bf16.mxu0 0
    %269 = vmatpush1.bf16.msra.mxu0 0
    %270 = vmatprep.subr.bf16.mxu0 0
    %271 = vmatpush1.bf16.msra.mxu0 0
    %272 = vmatprep.subr.bf16.mxu0 0
    %273 = vmatpush1.bf16.msra.mxu0 0
    %274 = vmatprep.subr.bf16.mxu0 0
    %275 = vmatpush1.bf16.msra.mxu0 0
    %276 = vmatprep.subr.bf16.mxu0 0
    %277 = vmatpush1.bf16.msra.mxu0 0
    %278 = vmatprep.subr.bf16.mxu0 0
    %279 = vmatpush1.bf16.msra.mxu0 0
    %280 = vmatprep.subr.bf16.mxu0 0
    %281 = vmatpush1.bf16.msra.mxu0 0
    %282 = vmatprep.mubr.bf16.mxu0 0
    %283 = vmatmul.mubr.bf16.gmra.mrb[0].mxu0 %v178
    %v284 = vpop.f32.mrb[0].mxu0
    %v285 = vadd.f32 %v200, %v284
    %v286 = vpop.f32.mrb[0].mxu0
    %v287 = vpop.f32.mrb[0].mxu0
    %v288 = vadd.f32 %v200, %v287
    %v289 = vpop.f32.mrb[0].mxu0
    %290 = vdwg.mxu0
    %v291 = vld [vmem:[%s5] sm:$0x1]
    %v292 = vld [vmem:[%s6] sm:$0x1]
    %293 = vadd.xlane.f32.xlu0 %v285
    %v294 = vpop.xlane.xlu0 %293
    %295 = vadd.xlane.f32.xlu0 %v288
    %v296 = vpop.xlane.xlu0 %295
    %v297 = vmul.f32 %v294, 0.015625
    %v298 = vmul.f32 %v296, 0.015625
    %v299 = vmul.f32 %v285, %v285
    %v300 = vmul.f32 %v288, %v288
    %301 = vadd.xlane.f32.xlu0 %v299
    %v302 = vpop.xlane.xlu0 %301
    %303 = vadd.xlane.f32.xlu0 %v300
    %v304 = vpop.xlane.xlu0 %303
    %v305 = vmul.f32 %v302, 0.015625
    %v306 = vmul.f32 %v304, 0.015625
    %v307 = vmul.f32 %v297, %v297
    %v308 = vmul.f32 %v298, %v298
    %v309 = vsub.f32 %v305, %v307
    %v310 = vsub.f32 %v306, %v308
    %v311 = vmax.f32 %v309, 0.0
    %v312 = vmax.f32 %v310, 0.0
    %v313 = vsub.f32 %v285, %v297
    %v314 = vsub.f32 %v288, %v298
    %v315 = vadd.f32 %v311, 1e-05
    %v316 = vadd.f32 %v312, 1e-05
    %v317 = vrsqrt.pop %v315
    %v318 = vrsqrt.pop %v316
    %v319 = vmul.f32 %v313, %v317
    %v320 = vmul.f32 %v314, %v318
    %v322 = vlaneseq
    %v323 = vshrl.u32 %v322, 7
    %v324 = vsub.s32 0, %v323
    %v325 = vrot.slane %v291, %v324
    %v327 = vmul.f32 %v319, %v325
    %v328 = vmul.f32 %v320, %v325
    %v330 = vlaneseq
    %v331 = vshrl.u32 %v330, 7
    %v332 = vsub.s32 0, %v331
    %v333 = vrot.slane %v292, %v332
    %v335 = vadd.f32 %v327, %v333
    %v336 = vadd.f32 %v328, %v333
    %v337 = vmul.f32 %v335, %v335
    %v338 = vmul.f32 %v336, %v336
    %v339 = vmul.f32 %v335, %v337
    %v340 = vmul.f32 %v336, %v338
    %v341 = vmul.f32 %v339, 0.044715
    %v342 = vmul.f32 %v340, 0.044715
    %v343 = vadd.f32 %v335, %v341
    %v344 = vadd.f32 %v336, %v342
    %v345 = vmul.f32 %v343, 0.7978846
    %v346 = vmul.f32 %v344, 0.7978846
    %v347 = vtanh.pop %v345
    %v348 = vtanh.pop %v346
    %v349 = vadd.f32 %v347, 1.0
    %v350 = vadd.f32 %v348, 1.0
    %v351 = vmul.f32 %v349, 0.5
    %v352 = vmul.f32 %v350, 0.5
    %v353 = vmul.f32 %v335, %v351
    %v354 = vmul.f32 %v336, %v352
    %v355 = vpack.c.bf16 %v354, %v353
    %v356 = vld [vmem:[#allocation8] sm:$0xf]
    %v357 = vld [vmem:[#allocation8 + $0x4] sm:$0xf]
    %v358 = vld [vmem:[#allocation8 + $0x8] sm:$0xf]
    %v359 = vld [vmem:[#allocation8 + $0xc] sm:$0xf]
    %v360 = vld [vmem:[#allocation8 + $0x10] sm:$0xf]
    %v361 = vld [vmem:[#allocation8 + $0x14] sm:$0xf]
    %v362 = vld [vmem:[#allocation8 + $0x18] sm:$0xf]
    %v363 = vld [vmem:[#allocation8 + $0x1c] sm:$0xf]
    %v364 = vld [vmem:[#allocation8 + $0x20] sm:$0xf]
    %v365 = vld [vmem:[#allocation8 + $0x24] sm:$0xf]
    %v366 = vld [vmem:[#allocation8 + $0x28] sm:$0xf]
    %v367 = vld [vmem:[#allocation8 + $0x2c] sm:$0xf]
    %v368 = vld [vmem:[#allocation8 + $0x30] sm:$0xf]
    %v369 = vld [vmem:[#allocation8 + $0x34] sm:$0xf]
    %v370 = vld [vmem:[#allocation8 + $0x38] sm:$0xf]
    %v371 = vld [vmem:[#allocation8 + $0x3c] sm:$0xf]
    %v372 = vld [vmem:[%s8] sm:$0x1]
    %v374 = vlaneseq
    %v375 = vshrl.u32 %v374, 7
    %v376 = vsub.s32 0, %v375
    %v377 = vrot.slane %v372, %v376
    %v395 = vunpack.c.l.b16 %v356
    %v396 = vunpack.c.l.b16 %v357
    %v397 = vunpack.c.l.b16 %v358
    %v398 = vunpack.c.l.b16 %v359
    %v399 = vunpack.c.l.b16 %v360
    %v400 = vunpack.c.l.b16 %v361
    %v401 = vunpack.c.l.b16 %v362
    %v402 = vunpack.c.l.b16 %v363
    %v403 = vunpack.c.l.b16 %v364
    %v404 = vunpack.c.l.b16 %v365
    %v405 = vunpack.c.l.b16 %v366
    %v406 = vunpack.c.l.b16 %v367
    %v407 = vunpack.c.l.b16 %v368
    %v408 = vunpack.c.l.b16 %v369
    %v409 = vunpack.c.l.b16 %v370
    %v410 = vunpack.c.l.b16 %v371
    %v411 = vpack.c.b16 %v396, %v395
    %v412 = vpack.c.b16 %v398, %v397
    %v413 = vpack.c.b16 %v400, %v399
    %v414 = vpack.c.b16 %v402, %v401
    %v415 = vpack.c.b16 %v404, %v403
    %v416 = vpack.c.b16 %v406, %v405
    %v417 = vpack.c.b16 %v408, %v407
    %v418 = vpack.c.b16 %v410, %v409
    %427 = vmatprep.subr.bf16.mxu0 0
    %428 = vmatpush1.bf16.msra.mxu0 %v411
    %429 = vmatprep.subr.bf16.mxu0 0
    %430 = vmatpush1.bf16.msra.mxu0 %v412
    %431 = vmatprep.subr.bf16.mxu0 0
    %432 = vmatpush1.bf16.msra.mxu0 %v413
    %433 = vmatprep.subr.bf16.mxu0 0
    %434 = vmatpush1.bf16.msra.mxu0 %v414
    %435 = vmatprep.subr.bf16.mxu0 0
    %436 = vmatpush1.bf16.msra.mxu0 %v415
    %437 = vmatprep.subr.bf16.mxu0 0
    %438 = vmatpush1.bf16.msra.mxu0 %v416
    %439 = vmatprep.subr.bf16.mxu0 0
    %440 = vmatpush1.bf16.msra.mxu0 %v417
    %441 = vmatprep.subr.bf16.mxu0 0
    %442 = vmatpush1.bf16.msra.mxu0 %v418
    %443 = vmatprep.subr.bf16.mxu0 0
    %444 = vmatpush1.bf16.msra.mxu0 0
    %445 = vmatprep.subr.bf16.mxu0 0
    %446 = vmatpush1.bf16.msra.mxu0 0
    %447 = vmatprep.subr.bf16.mxu0 0
    %448 = vmatpush1.bf16.msra.mxu0 0
    %449 = vmatprep.subr.bf16.mxu0 0
    %450 = vmatpush1.bf16.msra.mxu0 0
    %451 = vmatprep.subr.bf16.mxu0 0
    %452 = vmatpush1.bf16.msra.mxu0 0
    %453 = vmatprep.subr.bf16.mxu0 0
    %454 = vmatpush1.bf16.msra.mxu0 0
    %455 = vmatprep.subr.bf16.mxu0 0
    %456 = vmatpush1.bf16.msra.mxu0 0
    %457 = vmatprep.subr.bf16.mxu0 0
    %458 = vmatpush1.bf16.msra.mxu0 0
    %459 = vmatprep.mubr.bf16.mxu0 0
    %460 = vmatmul.mubr.bf16.gmra.mrb[0].mxu0 %v355
    %v461 = vpop.f32.mrb[0].mxu0
    %v462 = vadd.f32 %v377, %v461
    %v463 = vpop.f32.mrb[0].mxu0
    %v464 = vpop.f32.mrb[0].mxu0
    %v465 = vadd.f32 %v377, %v464
    %v466 = vpop.f32.mrb[0].mxu0
    %467 = vdwg.mxu0
    %v468 = vadd.f32 %v285, %v462
    %v469 = vadd.f32 %v288, %v465
    %s470 = scalar_lea.vmem %s5, 1
    %v471 = vld [vmem:[%s470] sm:$0x1]
    %s472 = scalar_lea.vmem %s6, 1
    %v473 = vld [vmem:[%s472] sm:$0x1]
    %474 = vadd.xlane.f32.xlu0 %v468
    %v475 = vpop.xlane.xlu0 %474
    %476 = vadd.xlane.f32.xlu0 %v469
    %v477 = vpop.xlane.xlu0 %476
    %v478 = vmul.f32 %v475, 0.015625
    %v479 = vmul.f32 %v477, 0.015625
    %v480 = vmul.f32 %v468, %v468
    %v481 = vmul.f32 %v469, %v469
    %482 = vadd.xlane.f32.xlu0 %v480
    %v483 = vpop.xlane.xlu0 %482
    %484 = vadd.xlane.f32.xlu0 %v481
    %v485 = vpop.xlane.xlu0 %484
    %v486 = vmul.f32 %v483, 0.015625
    %v487 = vmul.f32 %v485, 0.015625
    %v488 = vmul.f32 %v478, %v478
    %v489 = vmul.f32 %v479, %v479
    %v490 = vsub.f32 %v486, %v488
    %v491 = vsub.f32 %v487, %v489
    %v492 = vmax.f32 %v490, 0.0
    %v493 = vmax.f32 %v491, 0.0
    %v494 = vsub.f32 %v468, %v478
    %v495 = vsub.f32 %v469, %v479
    %v496 = vadd.f32 %v492, 1e-05
    %v497 = vadd.f32 %v493, 1e-05
    %v498 = vrsqrt.pop %v496
    %v499 = vrsqrt.pop %v497
    %v500 = vmul.f32 %v494, %v498
    %v501 = vmul.f32 %v495, %v499
    %v503 = vlaneseq
    %v504 = vshrl.u32 %v503, 7
    %v505 = vsub.s32 0, %v504
    %v506 = vrot.slane %v471, %v505
    %v508 = vmul.f32 %v500, %v506
    %v509 = vmul.f32 %v501, %v506
    %v511 = vlaneseq
    %v512 = vshrl.u32 %v511, 7
    %v513 = vsub.s32 0, %v512
    %v514 = vrot.slane %v473, %v513
    %v516 = vadd.f32 %v508, %v514
    %v517 = vadd.f32 %v509, %v514
    %v518 = vmul.f32 %v516, %v516
    %v519 = vmul.f32 %v517, %v517
    %v520 = vmul.f32 %v516, %v518
    %v521 = vmul.f32 %v517, %v519
    %v522 = vmul.f32 %v520, 0.044715
    %v523 = vmul.f32 %v521, 0.044715
    %v524 = vadd.f32 %v516, %v522
    %v525 = vadd.f32 %v517, %v523
    %v526 = vmul.f32 %v524, 0.7978846
    %v527 = vmul.f32 %v525, 0.7978846
    %v528 = vtanh.pop %v526
    %v529 = vtanh.pop %v527
    %v530 = vadd.f32 %v528, 1.0
    %v531 = vadd.f32 %v529, 1.0
    %v532 = vmul.f32 %v530, 0.5
    %v533 = vmul.f32 %v531, 0.5
    %v534 = vmul.f32 %v516, %v532
    %v535 = vmul.f32 %v517, %v533
    %v536 = vpack.c.bf16 %v535, %v534
    %s537 = scalar_lea.vmem [#allocation8], 64
    %v538 = vld [vmem:[%s537] sm:$0xf]
    %v539 = vld [vmem:[%s537 + $0x4] sm:$0xf]
    %v540 = vld [vmem:[%s537 + $0x8] sm:$0xf]
    %v541 = vld [vmem:[%s537 + $0xc] sm:$0xf]
    %v542 = vld [vmem:[%s537 + $0x10] sm:$0xf]
    %v543 = vld [vmem:[%s537 + $0x14] sm:$0xf]
    %v544 = vld [vmem:[%s537 + $0x18] sm:$0xf]
    %v545 = vld [vmem:[%s537 + $0x1c] sm:$0xf]
    %v546 = vld [vmem:[%s537 + $0x20] sm:$0xf]
    %v547 = vld [vmem:[%s537 + $0x24] sm:$0xf]
    %v548 = vld [vmem:[%s537 + $0x28] sm:$0xf]
    %v549 = vld [vmem:[%s537 + $0x2c] sm:$0xf]
    %v550 = vld [vmem:[%s537 + $0x30] sm:$0xf]
    %v551 = vld [vmem:[%s537 + $0x34] sm:$0xf]
    %v552 = vld [vmem:[%s537 + $0x38] sm:$0xf]
    %v553 = vld [vmem:[%s537 + $0x3c] sm:$0xf]
    %s554 = scalar_lea.vmem %s8, 1
    %v555 = vld [vmem:[%s554] sm:$0x1]
    %v557 = vlaneseq
    %v558 = vshrl.u32 %v557, 7
    %v559 = vsub.s32 0, %v558
    %v560 = vrot.slane %v555, %v559
    %v578 = vunpack.c.l.b16 %v538
    %v579 = vunpack.c.l.b16 %v539
    %v580 = vunpack.c.l.b16 %v540
    %v581 = vunpack.c.l.b16 %v541
    %v582 = vunpack.c.l.b16 %v542
    %v583 = vunpack.c.l.b16 %v543
    %v584 = vunpack.c.l.b16 %v544
    %v585 = vunpack.c.l.b16 %v545
    %v586 = vunpack.c.l.b16 %v546
    %v587 = vunpack.c.l.b16 %v547
    %v588 = vunpack.c.l.b16 %v548
    %v589 = vunpack.c.l.b16 %v549
    %v590 = vunpack.c.l.b16 %v550
    %v591 = vunpack.c.l.b16 %v551
    %v592 = vunpack.c.l.b16 %v552
    %v593 = vunpack.c.l.b16 %v553
    %v594 = vpack.c.b16 %v579, %v578
    %v595 = vpack.c.b16 %v581, %v580
    %v596 = vpack.c.b16 %v583, %v582
    %v597 = vpack.c.b16 %v585, %v584
    %v598 = vpack.c.b16 %v587, %v586
    %v599 = vpack.c.b16 %v589, %v588
    %v600 = vpack.c.b16 %v591, %v590
    %v601 = vpack.c.b16 %v593, %v592
    %610 = vmatprep.subr.bf16.mxu0 0
    %611 = vmatpush1.bf16.msra.mxu0 %v594
    %612 = vmatprep.subr.bf16.mxu0 0
    %613 = vmatpush1.bf16.msra.mxu0 %v595
    %614 = vmatprep.subr.bf16.mxu0 0
    %615 = vmatpush1.bf16.msra.mxu0 %v596
    %616 = vmatprep.subr.bf16.mxu0 0
    %617 = vmatpush1.bf16.msra.mxu0 %v597
    %618 = vmatprep.subr.bf16.mxu0 0
    %619 = vmatpush1.bf16.msra.mxu0 %v598
    %620 = vmatprep.subr.bf16.mxu0 0
    %621 = vmatpush1.bf16.msra.mxu0 %v599
    %622 = vmatprep.subr.bf16.mxu0 0
    %623 = vmatpush1.bf16.msra.mxu0 %v600
    %624 = vmatprep.subr.bf16.mxu0 0
    %625 = vmatpush1.bf16.msra.mxu0 %v601
    %626 = vmatprep.subr.bf16.mxu0 0
    %627 = vmatpush1.bf16.msra.mxu0 0
    %628 = vmatprep.subr.bf16.mxu0 0
    %629 = vmatpush1.bf16.msra.mxu0 0
    %630 = vmatprep.subr.bf16.mxu0 0
    %631 = vmatpush1.bf16.msra.mxu0 0
    %632 = vmatprep.subr.bf16.mxu0 0
    %633 = vmatpush1.bf16.msra.mxu0 0
    %634 = vmatprep.subr.bf16.mxu0 0
    %635 = vmatpush1.bf16.msra.mxu0 0
    %636 = vmatprep.subr.bf16.mxu0 0
    %637 = vmatpush1.bf16.msra.mxu0 0
    %638 = vmatprep.subr.bf16.mxu0 0
    %639 = vmatpush1.bf16.msra.mxu0 0
    %640 = vmatprep.subr.bf16.mxu0 0
    %641 = vmatpush1.bf16.msra.mxu0 0
    %642 = vmatprep.mubr.bf16.mxu0 0
    %643 = vmatmul.mubr.bf16.gmra.mrb[0].mxu0 %v536
    %v644 = vpop.f32.mrb[0].mxu0
    %v645 = vadd.f32 %v560, %v644
    %v646 = vpop.f32.mrb[0].mxu0
    %v647 = vpop.f32.mrb[0].mxu0
    %v648 = vadd.f32 %v560, %v647
    %v649 = vpop.f32.mrb[0].mxu0
    %650 = vdwg.mxu0
    %v651 = vadd.f32 %v468, %v645
    %v652 = vadd.f32 %v469, %v648
    %v653 = vld [vmem:[%s9] sm:$0x1]
    %v654 = vld [vmem:[%s10] sm:$0x1]
    %655 = vadd.xlane.f32.xlu0 %v651
    %v656 = vpop.xlane.xlu0 %655
    %657 = vadd.xlane.f32.xlu0 %v652
    %v658 = vpop.xlane.xlu0 %657
    %v659 = vmul.f32 %v656, 0.015625
    %v660 = vmul.f32 %v658, 0.015625
    %v661 = vmul.f32 %v651, %v651
    %v662 = vmul.f32 %v652, %v652
    %663 = vadd.xlane.f32.xlu0 %v661
    %v664 = vpop.xlane.xlu0 %663
    %665 = vadd.xlane.f32.xlu0 %v662
    %v666 = vpop.xlane.xlu0 %665
    %v667 = vmul.f32 %v664, 0.015625
    %v668 = vmul.f32 %v666, 0.015625
    %v669 = vmul.f32 %v659, %v659
    %v670 = vmul.f32 %v660, %v660
    %v671 = vsub.f32 %v667, %v669
    %v672 = vsub.f32 %v668, %v670
    %v673 = vmax.f32 %v671, 0.0
    %v674 = vmax.f32 %v672, 0.0
    %v675 = vsub.f32 %v651, %v659
    %v676 = vsub.f32 %v652, %v660
    %v677 = vadd.f32 %v673, 1e-05
    %v678 = vadd.f32 %v674, 1e-05
    %v679 = vrsqrt.pop %v677
    %v680 = vrsqrt.pop %v678
    %v681 = vmul.f32 %v675, %v679
    %v682 = vmul.f32 %v676, %v680
    %v684 = vlaneseq
    %v685 = vshrl.u32 %v684, 7
    %v686 = vsub.s32 0, %v685
    %v687 = vrot.slane %v653, %v686
    %v689 = vmul.f32 %v681, %v687
    %v690 = vmul.f32 %v682, %v687
    %v692 = vlaneseq
    %v693 = vshrl.u32 %v692, 7
    %v694 = vsub.s32 0, %v693
    %v695 = vrot.slane %v654, %v694
    %v697 = vadd.f32 %v689, %v695
    %v698 = vadd.f32 %v690, %v695
    %v699 = vmul.f32 %v697, %v697
    %v700 = vmul.f32 %v698, %v698
    %v701 = vmul.f32 %v697, %v699
    %v702 = vmul.f32 %v698, %v700
    %v703 = vmul.f32 %v701, 0.044715
    %v704 = vmul.f32 %v702, 0.044715
    %v705 = vadd.f32 %v697, %v703
    %v706 = vadd.f32 %v698, %v704
    %v707 = vmul.f32 %v705, 0.7978846
    %v708 = vmul.f32 %v706, 0.7978846
    %v709 = vtanh.pop %v707
    %v710 = vtanh.pop %v708
    %v711 = vadd.f32 %v709, 1.0
    %v712 = vadd.f32 %v710, 1.0
    %v713 = vmul.f32 %v711, 0.5
    %v714 = vmul.f32 %v712, 0.5
    %v715 = vmul.f32 %v697, %v713
    %v716 = vmul.f32 %v698, %v714
    %v717 = vpack.c.bf16 %v716, %v715
    %v718 = vld [vmem:[#allocation10] sm:$0xf]
    %v719 = vld [vmem:[#allocation10 + $0x4] sm:$0xf]
    %v720 = vld [vmem:[#allocation10 + $0x8] sm:$0xf]
    %v721 = vld [vmem:[#allocation10 + $0xc] sm:$0xf]
    %v722 = vld [vmem:[#allocation10 + $0x10] sm:$0xf]
    %v723 = vld [vmem:[#allocation10 + $0x14] sm:$0xf]
    %v724 = vld [vmem:[#allocation10 + $0x18] sm:$0xf]
    %v725 = vld [vmem:[#allocation10 + $0x1c] sm:$0xf]
    %v726 = vld [vmem:[#allocation10 + $0x20] sm:$0xf]
    %v727 = vld [vmem:[#allocation10 + $0x24] sm:$0xf]
    %v728 = vld [vmem:[#allocation10 + $0x28] sm:$0xf]
    %v729 = vld [vmem:[#allocation10 + $0x2c] sm:$0xf]
    %v730 = vld [vmem:[#allocation10 + $0x30] sm:$0xf]
    %v731 = vld [vmem:[#allocation10 + $0x34] sm:$0xf]
    %v732 = vld [vmem:[#allocation10 + $0x38] sm:$0xf]
    %v733 = vld [vmem:[#allocation10 + $0x3c] sm:$0xf]
    %v734 = vld [vmem:[%s12] sm:$0x1]
    %v736 = vlaneseq
    %v737 = vshrl.u32 %v736, 7
    %v738 = vsub.s32 0, %v737
    %v739 = vrot.slane %v734, %v738
    %v757 = vunpack.c.l.b16 %v718
    %v758 = vunpack.c.l.b16 %v719
    %v759 = vunpack.c.l.b16 %v720
    %v760 = vunpack.c.l.b16 %v721
    %v761 = vunpack.c.l.b16 %v722
    %v762 = vunpack.c.l.b16 %v723
    %v763 = vunpack.c.l.b16 %v724
    %v764 = vunpack.c.l.b16 %v725
    %v765 = vunpack.c.l.b16 %v726
    %v766 = vunpack.c.l.b16 %v727
    %v767 = vunpack.c.l.b16 %v728
    %v768 = vunpack.c.l.b16 %v729
    %v769 = vunpack.c.l.b16 %v730
    %v770 = vunpack.c.l.b16 %v731
    %v771 = vunpack.c.l.b16 %v732
    %v772 = vunpack.c.l.b16 %v733
    %v773 = vpack.c.b16 %v758, %v757
    %v774 = vpack.c.b16 %v760, %v759
    %v775 = vpack.c.b16 %v762, %v761
    %v776 = vpack.c.b16 %v764, %v763
    %v777 = vpack.c.b16 %v766, %v765
    %v778 = vpack.c.b16 %v768, %v767
    %v779 = vpack.c.b16 %v770, %v769
    %v780 = vpack.c.b16 %v772, %v771
    %789 = vmatprep.subr.bf16.mxu0 0
    %790 = vmatpush1.bf16.msra.mxu0 %v773
    %791 = vmatprep.subr.bf16.mxu0 0
    %792 = vmatpush1.bf16.msra.mxu0 %v774
    %793 = vmatprep.subr.bf16.mxu0 0
    %794 = vmatpush1.bf16.msra.mxu0 %v775
    %795 = vmatprep.subr.bf16.mxu0 0
    %796 = vmatpush1.bf16.msra.mxu0 %v776
    %797 = vmatprep.subr.bf16.mxu0 0
    %798 = vmatpush1.bf16.msra.mxu0 %v777
    %799 = vmatprep.subr.bf16.mxu0 0
    %800 = vmatpush1.bf16.msra.mxu0 %v778
    %801 = vmatprep.subr.bf16.mxu0 0
    %802 = vmatpush1.bf16.msra.mxu0 %v779
    %803 = vmatprep.subr.bf16.mxu0 0
    %804 = vmatpush1.bf16.msra.mxu0 %v780
    %805 = vmatprep.subr.bf16.mxu0 0
    %806 = vmatpush1.bf16.msra.mxu0 0
    %807 = vmatprep.subr.bf16.mxu0 0
    %808 = vmatpush1.bf16.msra.mxu0 0
    %809 = vmatprep.subr.bf16.mxu0 0
    %810 = vmatpush1.bf16.msra.mxu0 0
    %811 = vmatprep.subr.bf16.mxu0 0
    %812 = vmatpush1.bf16.msra.mxu0 0
    %813 = vmatprep.subr.bf16.mxu0 0
    %814 = vmatpush1.bf16.msra.mxu0 0
    %815 = vmatprep.subr.bf16.mxu0 0
    %816 = vmatpush1.bf16.msra.mxu0 0
    %817 = vmatprep.subr.bf16.mxu0 0
    %818 = vmatpush1.bf16.msra.mxu0 0
    %819 = vmatprep.subr.bf16.mxu0 0
    %820 = vmatpush1.bf16.msra.mxu0 0
    %821 = vmatprep.mubr.bf16.mxu0 0
    %822 = vmatmul.mubr.bf16.gmra.mrb[0].mxu0 %v717
    %v823 = vpop.f32.mrb[0].mxu0
    %v824 = vadd.f32 %v739, %v823
    %v825 = vpop.f32.mrb[0].mxu0
    %v826 = vpop.f32.mrb[0].mxu0
    %v827 = vadd.f32 %v739, %v826
    %v828 = vpop.f32.mrb[0].mxu0
    %829 = vdwg.mxu0
    %830 = vst [vmem:[#allocation11] sm:$0xff] %v824
    %831 = vst [vmem:[#allocation11 + $0x8] sm:$0xff] %v827
    // Predicated region
    $region74: #{tpu_custom_call.1} parent=1 // pred_check
      _
    $region75: #{tpu_custom_call.1} parent=1 // pred_check_branch
      %833 = sbr.rel (0) target = $region77
    $region76: #{tpu_custom_call.1} parent=1 // pred_region
      %s835 = ssub.s32 256, 256
      %836 = vsyncadd [#allocation4], %s835
      %s837 = sshll.u32 [#allocation11], 4
      %s838 = int_to_ptr.vmem [resolvable:$true] %s837
      %843 = dma.vmem_to_hbm [thread:$0]  %s838, 256, %s13, [#allocation4], 128, 128, 8
    $region77: #{tpu_custom_call.1} parent=1 // pred_fallthru
      _
    // Predicated region
    $region78: #{tpu_custom_call.1} parent=1 // pred_check
      _
    $region79: #{tpu_custom_call.1} parent=1 // pred_check_branch
      %845 = sbr.rel (0) target = $region81
    $region80: #{tpu_custom_call.1} parent=1 // pred_region
      %846 = dma.done [#allocation4], 256
    $region81: #{tpu_custom_call.1} parent=1 // pred_fallthru
      _
    %847 = vsyncpa [#allocation3], 1
    %848 = vsyncpa [#allocation6], 1
    %849 = vsyncpa [#allocation9], 1
    %850 = vsyncpa [#allocation4], 1

// kernel: tpu_custom_call.1
$region0: #{tpu_custom_call.1}
  #allocation0 [shape = 'u32[]', space=smem, size = 0x4, offset = 0x4, fixed_abs, tag = 'smem constant byte address 0x4 - core index']
  #allocation1 [shape = 'u32[144,128]{1,0:T(1,128)}', space=vmem, size = 0x12000, scoped, tag = 'internal scratch']
  %s0 = inlined_call_operand.hbm [shape: f32[16,128], index: 0, kind: input, shape index: {}]
  %s1 = inlined_call_operand.vmem [shape: f32[1,128], index: 1, kind: input, shape index: {}]
  %s2 = inlined_call_operand.hbm [shape: f32[1,128], index: 2, kind: input, shape index: {}]
  %s3 = inlined_call_operand.hbm [shape: bf16[128,128], index: 3, kind: input, shape index: {}]
  %s4 = inlined_call_operand.vmem [shape: f32[1,128], index: 4, kind: input, shape index: {}]
  %s5 = inlined_call_operand.vmem [shape: f32[2,1,128], index: 5, kind: input, shape index: {}]
  %s6 = inlined_call_operand.vmem [shape: f32[2,1,128], index: 6, kind: input, shape index: {}]
  %s7 = inlined_call_operand.hbm [shape: bf16[2,128,128], index: 7, kind: input, shape index: {}]
  %s8 = inlined_call_operand.vmem [shape: f32[2,1,128], index: 8, kind: input, shape index: {}]
  %s9 = inlined_call_operand.vmem [shape: f32[1,128], index: 9, kind: input, shape index: {}]
  %s10 = inlined_call_operand.vmem [shape: f32[1,128], index: 10, kind: input, shape index: {}]
  %s11 = inlined_call_operand.hbm [shape: bf16[128,128], index: 11, kind: input, shape index: {}]
  %s12 = inlined_call_operand.vmem [shape: f32[1,128], index: 12, kind: input, shape index: {}]
  %s13 = inlined_call_operand.hbm [shape: f32[16,128], index: 13, kind: output, shape index: {}]
  %s14 = sld [smem:[#allocation0]]
  $region82: #{tpu_custom_call.1} parent=0
    _
  %s16 = ssub.s32 1, %s14
  %s17 = scalar_select 0, %s16, %s14
  $region1: #{tpu_custom_call.1} parent=0
    #allocation2 [shape = 'u8[8192]{0}', space=vmem, size = 0x2000, scoped, tag = 'input window, operand 0, single buffered']
    #allocation3 [shape = 's32[1]{0}', space=sflag, size = 0x4, scoped, tag = 'scoped memory for tpu_custom_call.1']
    #allocation4 [shape = 's32[1]{0}', space=sflag, size = 0x4, scoped, tag = 'scoped memory for tpu_custom_call.1']
    #allocation5 [shape = 'u8[512]{0}', space=vmem, size = 0x400, scoped, tag = 'input window, operand 2, single buffered']
    #allocation6 [shape = 's32[1]{0}', space=sflag, size = 0x4, scoped, tag = 'scoped memory for tpu_custom_call.1']
    #allocation7 [shape = 'u8[32768]{0}', space=vmem, size = 0x8000, scoped, tag = 'input window, operand 3, single buffered']
    #allocation8 [shape = 'u8[65536]{0}', space=vmem, size = 0x10000, scoped, tag = 'input window, operand 7, single buffered']
    #allocation9 [shape = 's32[1]{0}', space=sflag, size = 0x4, scoped, tag = 'scoped memory for tpu_custom_call.1']
    #allocation10 [shape = 'u8[32768]{0}', space=vmem, size = 0x8000, scoped, tag = 'input window, operand 11, single buffered']
    #allocation11 [shape = 'u8[8192]{0}', space=vmem, size = 0x2000, scoped, tag = 'output window, operand 0, single buffered']
    %18 = vsyncpa [#allocation3], 0
    %19 = vsyncpa [#allocation6], 0
    %20 = vsyncpa [#allocation9], 0
    %21 = vsyncpa [#allocation4], 0
    // Predicated region
    $region2: #{tpu_custom_call.1} parent=1 // pred_check
      _
    $region3: #{tpu_custom_call.1} parent=1 // pred_check_branch
      %23 = sbr.rel (0) target = $region5
    $region4: #{tpu_custom_call.1} parent=1 // pred_region
      %s25 = ssub.s32 256, 256
      %26 = vsyncadd [#allocation3], %s25
      %s27 = sshll.u32 [#allocation2], 4
      %s28 = int_to_ptr.vmem [resolvable:$true] %s27
      %33 = dma.hbm_to_vmem [thread:$0]  %s0, 256, %s28, [#allocation3], 128, 128, 8
    $region5: #{tpu_custom_call.1} parent=1 // pred_fallthru
      _
    // Predicated region
    $region6: #{tpu_custom_call.1} parent=1 // pred_check
      _
    $region7: #{tpu_custom_call.1} parent=1 // pred_check_branch
      %35 = sbr.rel (0) target = $region9
    $region8: #{tpu_custom_call.1} parent=1 // pred_region
      _
    $region9: #{tpu_custom_call.1} parent=1 // pred_fallthru
      _
    // Predicated region
    $region10: #{tpu_custom_call.1} parent=1 // pred_check
      _
    $region11: #{tpu_custom_call.1} parent=1 // pred_check_branch
      %37 = sbr.rel (0) target = $region13
    $region12: #{tpu_custom_call.1} parent=1 // pred_region
      %s39 = ssub.s32 16, 16
      %40 = vsyncadd [#allocation6], %s39
      %s42 = sshll.u32 [#allocation5], 4
      %s43 = int_to_ptr.vmem [resolvable:$true] %s42
      %45 = dma.hbm_to_vmem [thread:$0]  %s2, 16, %s43, [#allocation6]
    $region13: #{tpu_custom_call.1} parent=1 // pred_fallthru
      _
    // Predicated region
    $region14: #{tpu_custom_call.1} parent=1 // pred_check
      _
    $region15: #{tpu_custom_call.1} parent=1 // pred_check_branch
      %47 = sbr.rel (0) target = $region17
    $region16: #{tpu_custom_call.1} parent=1 // pred_region
      %s49 = ssub.s32 1024, 1024
      %50 = vsyncadd [#allocation6], %s49
      %s51 = sshll.u32 [#allocation7], 4
      %s52 = int_to_ptr.vmem [resolvable:$true] %s51
      %57 = dma.hbm_to_vmem [thread:$0]  %s3, 1024, %s52, [#allocation6], 64, 64, 4
    $region17: #{tpu_custom_call.1} parent=1 // pred_fallthru
      _
    // Predicated region
    $region18: #{tpu_custom_call.1} parent=1 // pred_check
      _
    $region19: #{tpu_custom_call.1} parent=1 // pred_check_branch
      %59 = sbr.rel (0) target = $region21
    $region20: #{tpu_custom_call.1} parent=1 // pred_region
      _
    $region21: #{tpu_custom_call.1} parent=1 // pred_fallthru
      _
    // Predicated region
    $region22: #{tpu_custom_call.1} parent=1 // pred_check
      _
    $region23: #{tpu_custom_call.1} parent=1 // pred_check_branch
      %61 = sbr.rel (0) target = $region25
    $region24: #{tpu_custom_call.1} parent=1 // pred_region
      _
    $region25: #{tpu_custom_call.1} parent=1 // pred_fallthru
      _
    // Predicated region
    $region26: #{tpu_custom_call.1} parent=1 // pred_check
      _
    $region27: #{tpu_custom_call.1} parent=1 // pred_check_branch
      %63 = sbr.rel (0) target = $region29
    $region28: #{tpu_custom_call.1} parent=1 // pred_region
      _
    $region29: #{tpu_custom_call.1} parent=1 // pred_fallthru
      _
    // Predicated region
    $region30: #{tpu_custom_call.1} parent=1 // pred_check
      _
    $region31: #{tpu_custom_call.1} parent=1 // pred_check_branch
      %65 = sbr.rel (0) target = $region33
    $region32: #{tpu_custom_call.1} parent=1 // pred_region
      %s67 = ssub.s32 2048, 2048
      %68 = vsyncadd [#allocation9], %s67
      %s69 = sshll.u32 [#allocation8], 4
      %s70 = int_to_ptr.vmem [resolvable:$true] %s69
      %75 = dma.hbm_to_vmem [thread:$0]  %s7, 2048, %s70, [#allocation9], 64, 64, 4
    $region33: #{tpu_custom_call.1} parent=1 // pred_fallthru
      _
    // Predicated region
    $region34: #{tpu_custom_call.1} parent=1 // pred_check
      _
    $region35: #{tpu_custom_call.1} parent=1 // pred_check_branch
      %77 = sbr.rel (0) target = $region37
    $region36: #{tpu_custom_call.1} parent=1 // pred_region
      _
    $region37: #{tpu_custom_call.1} parent=1 // pred_fallthru
      _
    // Predicated region
    $region38: #{tpu_custom_call.1} parent=1 // pred_check
      _
    $region39: #{tpu_custom_call.1} parent=1 // pred_check_branch
      %79 = sbr.rel (0) target = $region41
    $region40: #{tpu_custom_call.1} parent=1 // pred_region
      _
    $region41: #{tpu_custom_call.1} parent=1 // pred_fallthru
      _
    // Predicated region
    $region42: #{tpu_custom_call.1} parent=1 // pred_check
      _
    $region43: #{tpu_custom_call.1} parent=1 // pred_check_branch
      %81 = sbr.rel (0) target = $region45
    $region44: #{tpu_custom_call.1} parent=1 // pred_region
      _
    $region45: #{tpu_custom_call.1} parent=1 // pred_fallthru
      _
    // Predicated region
    $region46: #{tpu_custom_call.1} parent=1 // pred_check
      _
    $region47: #{tpu_custom_call.1} parent=1 // pred_check_branch
      %83 = sbr.rel (0) target = $region49
    $region48: #{tpu_custom_call.1} parent=1 // pred_region
      %s85 = ssub.s32 1024, 1024
      %86 = vsyncadd [#allocation9], %s85
      %s87 = sshll.u32 [#allocation10], 4
      %s88 = int_to_ptr.vmem [resolvable:$true] %s87
      %93 = dma.hbm_to_vmem [thread:$0]  %s11, 1024, %s88, [#allocation9], 64, 64, 4
    $region49: #{tpu_custom_call.1} parent=1 // pred_fallthru
      _
    // Predicated region
    $region50: #{tpu_custom_call.1} parent=1 // pred_check
      _
    $region51: #{tpu_custom_call.1} parent=1 // pred_check_branch
      %95 = sbr.rel (0) target = $region53
    $region52: #{tpu_custom_call.1} parent=1 // pred_region
      _
    $region53: #{tpu_custom_call.1} parent=1 // pred_fallthru
      _
    // Predicated region
    $region54: #{tpu_custom_call.1} parent=1 // pred_check
      _
    $region55: #{tpu_custom_call.1} parent=1 // pred_check_branch
      %97 = sbr.rel (0) target = $region57
    $region56: #{tpu_custom_call.1} parent=1 // pred_region
      %98 = dma.done [#allocation3], 256
    $region57: #{tpu_custom_call.1} parent=1 // pred_fallthru
      _
    // Predicated region
    $region58: #{tpu_custom_call.1} parent=1 // pred_check
      _
    $region59: #{tpu_custom_call.1} parent=1 // pred_check_branch
      %100 = sbr.rel (0) target = $region61
    $region60: #{tpu_custom_call.1} parent=1 // pred_region
      %101 = dma.done [#allocation6], 16
    $region61: #{tpu_custom_call.1} parent=1 // pred_fallthru
      _
    // Predicated region
    $region62: #{tpu_custom_call.1} parent=1 // pred_check
      _
    $region63: #{tpu_custom_call.1} parent=1 // pred_check_branch
      %103 = sbr.rel (0) target = $region65
    $region64: #{tpu_custom_call.1} parent=1 // pred_region
      %104 = dma.done [#allocation6], 1024
    $region65: #{tpu_custom_call.1} parent=1 // pred_fallthru
      _
    // Predicated region
    $region66: #{tpu_custom_call.1} parent=1 // pred_check
      _
    $region67: #{tpu_custom_call.1} parent=1 // pred_check_branch
      %106 = sbr.rel (0) target = $region69
    $region68: #{tpu_custom_call.1} parent=1 // pred_region
      %107 = dma.done [#allocation9], 2048
    $region69: #{tpu_custom_call.1} parent=1 // pred_fallthru
      _
    // Predicated region
    $region70: #{tpu_custom_call.1} parent=1 // pred_check
      _
    $region71: #{tpu_custom_call.1} parent=1 // pred_check_branch
      %109 = sbr.rel (0) target = $region73
    $region72: #{tpu_custom_call.1} parent=1 // pred_region
      %110 = dma.done [#allocation9], 1024
    $region73: #{tpu_custom_call.1} parent=1 // pred_fallthru
      _
    %v112 = vld [vmem:[#allocation2] sm:$0xff]
    %v113 = vld [vmem:[#allocation2 + $0x8] sm:$0xff]
    %v114 = vld [vmem:[%s1] sm:$0x1]
    %v115 = vld [vmem:[#allocation5] sm:$0x1]
    %116 = vadd.xlane.f32.xlu0 %v112
    %v117 = vpop.xlane.xlu0 %116
    %118 = vadd.xlane.f32.xlu0 %v113
    %v119 = vpop.xlane.xlu0 %118
    %v120 = vmul.f32 %v117, 0.03125
    %v121 = vmul.f32 %v119, 0.03125
    %v122 = vmul.f32 %v112, %v112
    %v123 = vmul.f32 %v113, %v113
    %124 = vadd.xlane.f32.xlu0 %v122
    %v125 = vpop.xlane.xlu0 %124
    %126 = vadd.xlane.f32.xlu0 %v123
    %v127 = vpop.xlane.xlu0 %126
    %v128 = vmul.f32 %v125, 0.03125
    %v129 = vmul.f32 %v127, 0.03125
    %v130 = vmul.f32 %v120, %v120
    %v131 = vmul.f32 %v121, %v121
    %v132 = vsub.f32 %v128, %v130
    %v133 = vsub.f32 %v129, %v131
    %v134 = vmax.f32 %v132, 0.0
    %v135 = vmax.f32 %v133, 0.0
    %v136 = vsub.f32 %v112, %v120
    %v137 = vsub.f32 %v113, %v121
    %v138 = vadd.f32 %v134, 1e-05
    %v139 = vadd.f32 %v135, 1e-05
    %v140 = vrsqrt.pop %v138
    %v141 = vrsqrt.pop %v139
    %v142 = vmul.f32 %v136, %v140
    %v143 = vmul.f32 %v137, %v141
    %v145 = vlaneseq
    %v146 = vshrl.u32 %v145, 7
    %v147 = vsub.s32 0, %v146
    %v148 = vrot.slane %v114, %v147
    %v150 = vmul.f32 %v142, %v148
    %v151 = vmul.f32 %v143, %v148
    %v153 = vlaneseq
    %v154 = vshrl.u32 %v153, 7
    %v155 = vsub.s32 0, %v154
    %v156 = vrot.slane %v115, %v155
    %v158 = vadd.f32 %v150, %v156
    %v159 = vadd.f32 %v151, %v156
    %v160 = vmul.f32 %v158, %v158
    %v161 = vmul.f32 %v159, %v159
    %v162 = vmul.f32 %v158, %v160
    %v163 = vmul.f32 %v159, %v161
    %v164 = vmul.f32 %v162, 0.044715
    %v165 = vmul.f32 %v163, 0.044715
    %v166 = vadd.f32 %v158, %v164
    %v167 = vadd.f32 %v159, %v165
    %v168 = vmul.f32 %v166, 0.7978846
    %v169 = vmul.f32 %v167, 0.7978846
    %v170 = vtanh.pop %v168
    %v171 = vtanh.pop %v169
    %v172 = vadd.f32 %v170, 1.0
    %v173 = vadd.f32 %v171, 1.0
    %v174 = vmul.f32 %v172, 0.5
    %v175 = vmul.f32 %v173, 0.5
    %v176 = vmul.f32 %v158, %v174
    %v177 = vmul.f32 %v159, %v175
    %v178 = vpack.c.bf16 %v177, %v176
    %v179 = vld [vmem:[#allocation7] sm:$0xf]
    %v180 = vld [vmem:[#allocation7 + $0x4] sm:$0xf]
    %v181 = vld [vmem:[#allocation7 + $0x8] sm:$0xf]
    %v182 = vld [vmem:[#allocation7 + $0xc] sm:$0xf]
    %v183 = vld [vmem:[#allocation7 + $0x10] sm:$0xf]
    %v184 = vld [vmem:[#allocation7 + $0x14] sm:$0xf]
    %v185 = vld [vmem:[#allocation7 + $0x18] sm:$0xf]
    %v186 = vld [vmem:[#allocation7 + $0x1c] sm:$0xf]
    %v187 = vld [vmem:[#allocation7 + $0x20] sm:$0xf]
    %v188 = vld [vmem:[#allocation7 + $0x24] sm:$0xf]
    %v189 = vld [vmem:[#allocation7 + $0x28] sm:$0xf]
    %v190 = vld [vmem:[#allocation7 + $0x2c] sm:$0xf]
    %v191 = vld [vmem:[#allocation7 + $0x30] sm:$0xf]
    %v192 = vld [vmem:[#allocation7 + $0x34] sm:$0xf]
    %v193 = vld [vmem:[#allocation7 + $0x38] sm:$0xf]
    %v194 = vld [vmem:[#allocation7 + $0x3c] sm:$0xf]
    %v195 = vld [vmem:[%s4] sm:$0x1]
    %v197 = vlaneseq
    %v198 = vshrl.u32 %v197, 7
    %v199 = vsub.s32 0, %v198
    %v200 = vrot.slane %v195, %v199
    %v218 = vunpack.c.l.b16 %v179
    %v219 = vunpack.c.l.b16 %v180
    %v220 = vunpack.c.l.b16 %v181
    %v221 = vunpack.c.l.b16 %v182
    %v222 = vunpack.c.l.b16 %v183
    %v223 = vunpack.c.l.b16 %v184
    %v224 = vunpack.c.l.b16 %v185
    %v225 = vunpack.c.l.b16 %v186
    %v226 = vunpack.c.l.b16 %v187
    %v227 = vunpack.c.l.b16 %v188
    %v228 = vunpack.c.l.b16 %v189
    %v229 = vunpack.c.l.b16 %v190
    %v230 = vunpack.c.l.b16 %v191
    %v231 = vunpack.c.l.b16 %v192
    %v232 = vunpack.c.l.b16 %v193
    %v233 = vunpack.c.l.b16 %v194
    %v234 = vpack.c.b16 %v219, %v218
    %v235 = vpack.c.b16 %v221, %v220
    %v236 = vpack.c.b16 %v223, %v222
    %v237 = vpack.c.b16 %v225, %v224
    %v238 = vpack.c.b16 %v227, %v226
    %v239 = vpack.c.b16 %v229, %v228
    %v240 = vpack.c.b16 %v231, %v230
    %v241 = vpack.c.b16 %v233, %v232
    %250 = vmatprep.subr.bf16.mxu0 0
    %251 = vmatpush1.bf16.msra.mxu0 %v234
    %252 = vmatprep.subr.bf16.mxu0 0
    %253 = vmatpush1.bf16.msra.mxu0 %v235
    %254 = vmatprep.subr.bf16.mxu0 0
    %255 = vmatpush1.bf16.msra.mxu0 %v236
    %256 = vmatprep.subr.bf16.mxu0 0
    %257 = vmatpush1.bf16.msra.mxu0 %v237
    %258 = vmatprep.subr.bf16.mxu0 0
    %259 = vmatpush1.bf16.msra.mxu0 %v238
    %260 = vmatprep.subr.bf16.mxu0 0
    %261 = vmatpush1.bf16.msra.mxu0 %v239
    %262 = vmatprep.subr.bf16.mxu0 0
    %263 = vmatpush1.bf16.msra.mxu0 %v240
    %264 = vmatprep.subr.bf16.mxu0 0
    %265 = vmatpush1.bf16.msra.mxu0 %v241
    %266 = vmatprep.subr.bf16.mxu0 0
    %267 = vmatpush1.bf16.msra.mxu0 0
    %268 = vmatprep.subr.bf16.mxu0 0
    %269 = vmatpush1.bf16.msra.mxu0 0
    %270 = vmatprep.subr.bf16.mxu0 0
    %271 = vmatpush1.bf16.msra.mxu0 0
    %272 = vmatprep.subr.bf16.mxu0 0
    %273 = vmatpush1.bf16.msra.mxu0 0
    %274 = vmatprep.subr.bf16.mxu0 0
    %275 = vmatpush1.bf16.msra.mxu0 0
    %276 = vmatprep.subr.bf16.mxu0 0
    %277 = vmatpush1.bf16.msra.mxu0 0
    %278 = vmatprep.subr.bf16.mxu0 0
    %279 = vmatpush1.bf16.msra.mxu0 0
    %280 = vmatprep.subr.bf16.mxu0 0
    %281 = vmatpush1.bf16.msra.mxu0 0
    %282 = vmatprep.mubr.bf16.mxu0 0
    %283 = vmatmul.mubr.bf16.gmra.mrb[0].mxu0 %v178
    %v284 = vpop.f32.mrb[0].mxu0
    %v285 = vadd.f32 %v200, %v284
    %v286 = vpop.f32.mrb[0].mxu0
    %v287 = vpop.f32.mrb[0].mxu0
    %v288 = vadd.f32 %v200, %v287
    %v289 = vpop.f32.mrb[0].mxu0
    %290 = vdwg.mxu0
    %v291 = vld [vmem:[%s5] sm:$0x1]
    %v292 = vld [vmem:[%s6] sm:$0x1]
    %293 = vadd.xlane.f32.xlu0 %v285
    %v294 = vpop.xlane.xlu0 %293
    %295 = vadd.xlane.f32.xlu0 %v288
    %v296 = vpop.xlane.xlu0 %295
    %v297 = vmul.f32 %v294, 0.015625
    %v298 = vmul.f32 %v296, 0.015625
    %v299 = vmul.f32 %v285, %v285
    %v300 = vmul.f32 %v288, %v288
    %301 = vadd.xlane.f32.xlu0 %v299
    %v302 = vpop.xlane.xlu0 %301
    %303 = vadd.xlane.f32.xlu0 %v300
    %v304 = vpop.xlane.xlu0 %303
    %v305 = vmul.f32 %v302, 0.015625
    %v306 = vmul.f32 %v304, 0.015625
    %v307 = vmul.f32 %v297, %v297
    %v308 = vmul.f32 %v298, %v298
    %v309 = vsub.f32 %v305, %v307
    %v310 = vsub.f32 %v306, %v308
    %v311 = vmax.f32 %v309, 0.0
    %v312 = vmax.f32 %v310, 0.0
    %v313 = vsub.f32 %v285, %v297
    %v314 = vsub.f32 %v288, %v298
    %v315 = vadd.f32 %v311, 1e-05
    %v316 = vadd.f32 %v312, 1e-05
    %v317 = vrsqrt.pop %v315
    %v318 = vrsqrt.pop %v316
    %v319 = vmul.f32 %v313, %v317
    %v320 = vmul.f32 %v314, %v318
    %v322 = vlaneseq
    %v323 = vshrl.u32 %v322, 7
    %v324 = vsub.s32 0, %v323
    %v325 = vrot.slane %v291, %v324
    %v327 = vmul.f32 %v319, %v325
    %v328 = vmul.f32 %v320, %v325
    %v330 = vlaneseq
    %v331 = vshrl.u32 %v330, 7
    %v332 = vsub.s32 0, %v331
    %v333 = vrot.slane %v292, %v332
    %v335 = vadd.f32 %v327, %v333
    %v336 = vadd.f32 %v328, %v333
    %v337 = vmul.f32 %v335, %v335
    %v338 = vmul.f32 %v336, %v336
    %v339 = vmul.f32 %v335, %v337
    %v340 = vmul.f32 %v336, %v338
    %v341 = vmul.f32 %v339, 0.044715
    %v342 = vmul.f32 %v340, 0.044715
    %v343 = vadd.f32 %v335, %v341
    %v344 = vadd.f32 %v336, %v342
    %v345 = vmul.f32 %v343, 0.7978846
    %v346 = vmul.f32 %v344, 0.7978846
    %v347 = vtanh.pop %v345
    %v348 = vtanh.pop %v346
    %v349 = vadd.f32 %v347, 1.0
    %v350 = vadd.f32 %v348, 1.0
    %v351 = vmul.f32 %v349, 0.5
    %v352 = vmul.f32 %v350, 0.5
    %v353 = vmul.f32 %v335, %v351
    %v354 = vmul.f32 %v336, %v352
    %v355 = vpack.c.bf16 %v354, %v353
    %v356 = vld [vmem:[#allocation8] sm:$0xf]
    %v357 = vld [vmem:[#allocation8 + $0x4] sm:$0xf]
    %v358 = vld [vmem:[#allocation8 + $0x8] sm:$0xf]
    %v359 = vld [vmem:[#allocation8 + $0xc] sm:$0xf]
    %v360 = vld [vmem:[#allocation8 + $0x10] sm:$0xf]
    %v361 = vld [vmem:[#allocation8 + $0x14] sm:$0xf]
    %v362 = vld [vmem:[#allocation8 + $0x18] sm:$0xf]
    %v363 = vld [vmem:[#allocation8 + $0x1c] sm:$0xf]
    %v364 = vld [vmem:[#allocation8 + $0x20] sm:$0xf]
    %v365 = vld [vmem:[#allocation8 + $0x24] sm:$0xf]
    %v366 = vld [vmem:[#allocation8 + $0x28] sm:$0xf]
    %v367 = vld [vmem:[#allocation8 + $0x2c] sm:$0xf]
    %v368 = vld [vmem:[#allocation8 + $0x30] sm:$0xf]
    %v369 = vld [vmem:[#allocation8 + $0x34] sm:$0xf]
    %v370 = vld [vmem:[#allocation8 + $0x38] sm:$0xf]
    %v371 = vld [vmem:[#allocation8 + $0x3c] sm:$0xf]
    %v372 = vld [vmem:[%s8] sm:$0x1]
    %v374 = vlaneseq
    %v375 = vshrl.u32 %v374, 7
    %v376 = vsub.s32 0, %v375
    %v377 = vrot.slane %v372, %v376
    %v395 = vunpack.c.l.b16 %v356
    %v396 = vunpack.c.l.b16 %v357
    %v397 = vunpack.c.l.b16 %v358
    %v398 = vunpack.c.l.b16 %v359
    %v399 = vunpack.c.l.b16 %v360
    %v400 = vunpack.c.l.b16 %v361
    %v401 = vunpack.c.l.b16 %v362
    %v402 = vunpack.c.l.b16 %v363
    %v403 = vunpack.c.l.b16 %v364
    %v404 = vunpack.c.l.b16 %v365
    %v405 = vunpack.c.l.b16 %v366
    %v406 = vunpack.c.l.b16 %v367
    %v407 = vunpack.c.l.b16 %v368
    %v408 = vunpack.c.l.b16 %v369
    %v409 = vunpack.c.l.b16 %v370
    %v410 = vunpack.c.l.b16 %v371
    %v411 = vpack.c.b16 %v396, %v395
    %v412 = vpack.c.b16 %v398, %v397
    %v413 = vpack.c.b16 %v400, %v399
    %v414 = vpack.c.b16 %v402, %v401
    %v415 = vpack.c.b16 %v404, %v403
    %v416 = vpack.c.b16 %v406, %v405
    %v417 = vpack.c.b16 %v408, %v407
    %v418 = vpack.c.b16 %v410, %v409
    %427 = vmatprep.subr.bf16.mxu0 0
    %428 = vmatpush1.bf16.msra.mxu0 %v411
    %429 = vmatprep.subr.bf16.mxu0 0
    %430 = vmatpush1.bf16.msra.mxu0 %v412
    %431 = vmatprep.subr.bf16.mxu0 0
    %432 = vmatpush1.bf16.msra.mxu0 %v413
    %433 = vmatprep.subr.bf16.mxu0 0
    %434 = vmatpush1.bf16.msra.mxu0 %v414
    %435 = vmatprep.subr.bf16.mxu0 0
    %436 = vmatpush1.bf16.msra.mxu0 %v415
    %437 = vmatprep.subr.bf16.mxu0 0
    %438 = vmatpush1.bf16.msra.mxu0 %v416
    %439 = vmatprep.subr.bf16.mxu0 0
    %440 = vmatpush1.bf16.msra.mxu0 %v417
    %441 = vmatprep.subr.bf16.mxu0 0
    %442 = vmatpush1.bf16.msra.mxu0 %v418
    %443 = vmatprep.subr.bf16.mxu0 0
    %444 = vmatpush1.bf16.msra.mxu0 0
    %445 = vmatprep.subr.bf16.mxu0 0
    %446 = vmatpush1.bf16.msra.mxu0 0
    %447 = vmatprep.subr.bf16.mxu0 0
    %448 = vmatpush1.bf16.msra.mxu0 0
    %449 = vmatprep.subr.bf16.mxu0 0
    %450 = vmatpush1.bf16.msra.mxu0 0
    %451 = vmatprep.subr.bf16.mxu0 0
    %452 = vmatpush1.bf16.msra.mxu0 0
    %453 = vmatprep.subr.bf16.mxu0 0
    %454 = vmatpush1.bf16.msra.mxu0 0
    %455 = vmatprep.subr.bf16.mxu0 0
    %456 = vmatpush1.bf16.msra.mxu0 0
    %457 = vmatprep.subr.bf16.mxu0 0
    %458 = vmatpush1.bf16.msra.mxu0 0
    %459 = vmatprep.mubr.bf16.mxu0 0
    %460 = vmatmul.mubr.bf16.gmra.mrb[0].mxu0 %v355
    %v461 = vpop.f32.mrb[0].mxu0
    %v462 = vadd.f32 %v377, %v461
    %v463 = vpop.f32.mrb[0].mxu0
    %v464 = vpop.f32.mrb[0].mxu0
    %v465 = vadd.f32 %v377, %v464
    %v466 = vpop.f32.mrb[0].mxu0
    %467 = vdwg.mxu0
    %v468 = vadd.f32 %v285, %v462
    %v469 = vadd.f32 %v288, %v465
    %s470 = scalar_lea.vmem %s5, 1
    %v471 = vld [vmem:[%s470] sm:$0x1]
    %s472 = scalar_lea.vmem %s6, 1
    %v473 = vld [vmem:[%s472] sm:$0x1]
    %474 = vadd.xlane.f32.xlu0 %v468
    %v475 = vpop.xlane.xlu0 %474
    %476 = vadd.xlane.f32.xlu0 %v469
    %v477 = vpop.xlane.xlu0 %476
    %v478 = vmul.f32 %v475, 0.015625
    %v479 = vmul.f32 %v477, 0.015625
    %v480 = vmul.f32 %v468, %v468
    %v481 = vmul.f32 %v469, %v469
    %482 = vadd.xlane.f32.xlu0 %v480
    %v483 = vpop.xlane.xlu0 %482
    %484 = vadd.xlane.f32.xlu0 %v481
    %v485 = vpop.xlane.xlu0 %484
    %v486 = vmul.f32 %v483, 0.015625
    %v487 = vmul.f32 %v485, 0.015625
    %v488 = vmul.f32 %v478, %v478
    %v489 = vmul.f32 %v479, %v479
    %v490 = vsub.f32 %v486, %v488
    %v491 = vsub.f32 %v487, %v489
    %v492 = vmax.f32 %v490, 0.0
    %v493 = vmax.f32 %v491, 0.0
    %v494 = vsub.f32 %v468, %v478
    %v495 = vsub.f32 %v469, %v479
    %v496 = vadd.f32 %v492, 1e-05
    %v497 = vadd.f32 %v493, 1e-05
    %v498 = vrsqrt.pop %v496
    %v499 = vrsqrt.pop %v497
    %v500 = vmul.f32 %v494, %v498
    %v501 = vmul.f32 %v495, %v499
    %v503 = vlaneseq
    %v504 = vshrl.u32 %v503, 7
    %v505 = vsub.s32 0, %v504
    %v506 = vrot.slane %v471, %v505
    %v508 = vmul.f32 %v500, %v506
    %v509 = vmul.f32 %v501, %v506
    %v511 = vlaneseq
    %v512 = vshrl.u32 %v511, 7
    %v513 = vsub.s32 0, %v512
    %v514 = vrot.slane %v473, %v513
    %v516 = vadd.f32 %v508, %v514
    %v517 = vadd.f32 %v509, %v514
    %v518 = vmul.f32 %v516, %v516
    %v519 = vmul.f32 %v517, %v517
    %v520 = vmul.f32 %v516, %v518
    %v521 = vmul.f32 %v517, %v519
    %v522 = vmul.f32 %v520, 0.044715
    %v523 = vmul.f32 %v521, 0.044715
    %v524 = vadd.f32 %v516, %v522
    %v525 = vadd.f32 %v517, %v523
    %v526 = vmul.f32 %v524, 0.7978846
    %v527 = vmul.f32 %v525, 0.7978846
    %v528 = vtanh.pop %v526
    %v529 = vtanh.pop %v527
    %v530 = vadd.f32 %v528, 1.0
    %v531 = vadd.f32 %v529, 1.0
    %v532 = vmul.f32 %v530, 0.5
    %v533 = vmul.f32 %v531, 0.5
    %v534 = vmul.f32 %v516, %v532
    %v535 = vmul.f32 %v517, %v533
    %v536 = vpack.c.bf16 %v535, %v534
    %s537 = scalar_lea.vmem [#allocation8], 64
    %v538 = vld [vmem:[%s537] sm:$0xf]
    %v539 = vld [vmem:[%s537 + $0x4] sm:$0xf]
    %v540 = vld [vmem:[%s537 + $0x8] sm:$0xf]
    %v541 = vld [vmem:[%s537 + $0xc] sm:$0xf]
    %v542 = vld [vmem:[%s537 + $0x10] sm:$0xf]
    %v543 = vld [vmem:[%s537 + $0x14] sm:$0xf]
    %v544 = vld [vmem:[%s537 + $0x18] sm:$0xf]
    %v545 = vld [vmem:[%s537 + $0x1c] sm:$0xf]
    %v546 = vld [vmem:[%s537 + $0x20] sm:$0xf]
    %v547 = vld [vmem:[%s537 + $0x24] sm:$0xf]
    %v548 = vld [vmem:[%s537 + $0x28] sm:$0xf]
    %v549 = vld [vmem:[%s537 + $0x2c] sm:$0xf]
    %v550 = vld [vmem:[%s537 + $0x30] sm:$0xf]
    %v551 = vld [vmem:[%s537 + $0x34] sm:$0xf]
    %v552 = vld [vmem:[%s537 + $0x38] sm:$0xf]
    %v553 = vld [vmem:[%s537 + $0x3c] sm:$0xf]
    %s554 = scalar_lea.vmem %s8, 1
    %v555 = vld [vmem:[%s554] sm:$0x1]
    %v557 = vlaneseq
    %v558 = vshrl.u32 %v557, 7
    %v559 = vsub.s32 0, %v558
    %v560 = vrot.slane %v555, %v559
    %v578 = vunpack.c.l.b16 %v538
    %v579 = vunpack.c.l.b16 %v539
    %v580 = vunpack.c.l.b16 %v540
    %v581 = vunpack.c.l.b16 %v541
    %v582 = vunpack.c.l.b16 %v542
    %v583 = vunpack.c.l.b16 %v543
    %v584 = vunpack.c.l.b16 %v544
    %v585 = vunpack.c.l.b16 %v545
    %v586 = vunpack.c.l.b16 %v546
    %v587 = vunpack.c.l.b16 %v547
    %v588 = vunpack.c.l.b16 %v548
    %v589 = vunpack.c.l.b16 %v549
    %v590 = vunpack.c.l.b16 %v550
    %v591 = vunpack.c.l.b16 %v551
    %v592 = vunpack.c.l.b16 %v552
    %v593 = vunpack.c.l.b16 %v553
    %v594 = vpack.c.b16 %v579, %v578
    %v595 = vpack.c.b16 %v581, %v580
    %v596 = vpack.c.b16 %v583, %v582
    %v597 = vpack.c.b16 %v585, %v584
    %v598 = vpack.c.b16 %v587, %v586
    %v599 = vpack.c.b16 %v589, %v588
    %v600 = vpack.c.b16 %v591, %v590
    %v601 = vpack.c.b16 %v593, %v592
    %610 = vmatprep.subr.bf16.mxu0 0
    %611 = vmatpush1.bf16.msra.mxu0 %v594
    %612 = vmatprep.subr.bf16.mxu0 0
    %613 = vmatpush1.bf16.msra.mxu0 %v595
    %614 = vmatprep.subr.bf16.mxu0 0
    %615 = vmatpush1.bf16.msra.mxu0 %v596
    %616 = vmatprep.subr.bf16.mxu0 0
    %617 = vmatpush1.bf16.msra.mxu0 %v597
    %618 = vmatprep.subr.bf16.mxu0 0
    %619 = vmatpush1.bf16.msra.mxu0 %v598
    %620 = vmatprep.subr.bf16.mxu0 0
    %621 = vmatpush1.bf16.msra.mxu0 %v599
    %622 = vmatprep.subr.bf16.mxu0 0
    %623 = vmatpush1.bf16.msra.mxu0 %v600
    %624 = vmatprep.subr.bf16.mxu0 0
    %625 = vmatpush1.bf16.msra.mxu0 %v601
    %626 = vmatprep.subr.bf16.mxu0 0
    %627 = vmatpush1.bf16.msra.mxu0 0
    %628 = vmatprep.subr.bf16.mxu0 0
    %629 = vmatpush1.bf16.msra.mxu0 0
    %630 = vmatprep.subr.bf16.mxu0 0
    %631 = vmatpush1.bf16.msra.mxu0 0
    %632 = vmatprep.subr.bf16.mxu0 0
    %633 = vmatpush1.bf16.msra.mxu0 0
    %634 = vmatprep.subr.bf16.mxu0 0
    %635 = vmatpush1.bf16.msra.mxu0 0
    %636 = vmatprep.subr.bf16.mxu0 0
    %637 = vmatpush1.bf16.msra.mxu0 0
    %638 = vmatprep.subr.bf16.mxu0 0
    %639 = vmatpush1.bf16.msra.mxu0 0
    %640 = vmatprep.subr.bf16.mxu0 0
    %641 = vmatpush1.bf16.msra.mxu0 0
    %642 = vmatprep.mubr.bf16.mxu0 0
    %643 = vmatmul.mubr.bf16.gmra.mrb[0].mxu0 %v536
    %v644 = vpop.f32.mrb[0].mxu0
    %v645 = vadd.f32 %v560, %v644
    %v646 = vpop.f32.mrb[0].mxu0
    %v647 = vpop.f32.mrb[0].mxu0
    %v648 = vadd.f32 %v560, %v647
    %v649 = vpop.f32.mrb[0].mxu0
    %650 = vdwg.mxu0
    %v651 = vadd.f32 %v468, %v645
    %v652 = vadd.f32 %v469, %v648
    %v653 = vld [vmem:[%s9] sm:$0x1]
    %v654 = vld [vmem:[%s10] sm:$0x1]
    %655 = vadd.xlane.f32.xlu0 %v651
    %v656 = vpop.xlane.xlu0 %655
    %657 = vadd.xlane.f32.xlu0 %v652
    %v658 = vpop.xlane.xlu0 %657
    %v659 = vmul.f32 %v656, 0.015625
    %v660 = vmul.f32 %v658, 0.015625
    %v661 = vmul.f32 %v651, %v651
    %v662 = vmul.f32 %v652, %v652
    %663 = vadd.xlane.f32.xlu0 %v661
    %v664 = vpop.xlane.xlu0 %663
    %665 = vadd.xlane.f32.xlu0 %v662
    %v666 = vpop.xlane.xlu0 %665
    %v667 = vmul.f32 %v664, 0.015625
    %v668 = vmul.f32 %v666, 0.015625
    %v669 = vmul.f32 %v659, %v659
    %v670 = vmul.f32 %v660, %v660
    %v671 = vsub.f32 %v667, %v669
    %v672 = vsub.f32 %v668, %v670
    %v673 = vmax.f32 %v671, 0.0
    %v674 = vmax.f32 %v672, 0.0
    %v675 = vsub.f32 %v651, %v659
    %v676 = vsub.f32 %v652, %v660
    %v677 = vadd.f32 %v673, 1e-05
    %v678 = vadd.f32 %v674, 1e-05
    %v679 = vrsqrt.pop %v677
    %v680 = vrsqrt.pop %v678
    %v681 = vmul.f32 %v675, %v679
    %v682 = vmul.f32 %v676, %v680
    %v684 = vlaneseq
    %v685 = vshrl.u32 %v684, 7
    %v686 = vsub.s32 0, %v685
    %v687 = vrot.slane %v653, %v686
    %v689 = vmul.f32 %v681, %v687
    %v690 = vmul.f32 %v682, %v687
    %v692 = vlaneseq
    %v693 = vshrl.u32 %v692, 7
    %v694 = vsub.s32 0, %v693
    %v695 = vrot.slane %v654, %v694
    %v697 = vadd.f32 %v689, %v695
    %v698 = vadd.f32 %v690, %v695
    %v699 = vmul.f32 %v697, %v697
    %v700 = vmul.f32 %v698, %v698
    %v701 = vmul.f32 %v697, %v699
    %v702 = vmul.f32 %v698, %v700
    %v703 = vmul.f32 %v701, 0.044715
    %v704 = vmul.f32 %v702, 0.044715
    %v705 = vadd.f32 %v697, %v703
    %v706 = vadd.f32 %v698, %v704
    %v707 = vmul.f32 %v705, 0.7978846
    %v708 = vmul.f32 %v706, 0.7978846
    %v709 = vtanh.pop %v707
    %v710 = vtanh.pop %v708
    %v711 = vadd.f32 %v709, 1.0
    %v712 = vadd.f32 %v710, 1.0
    %v713 = vmul.f32 %v711, 0.5
    %v714 = vmul.f32 %v712, 0.5
    %v715 = vmul.f32 %v697, %v713
    %v716 = vmul.f32 %v698, %v714
    %v717 = vpack.c.bf16 %v716, %v715
    %v718 = vld [vmem:[#allocation10] sm:$0xf]
    %v719 = vld [vmem:[#allocation10 + $0x4] sm:$0xf]
    %v720 = vld [vmem:[#allocation10 + $0x8] sm:$0xf]
    %v721 = vld [vmem:[#allocation10 + $0xc] sm:$0xf]
    %v722 = vld [vmem:[#allocation10 + $0x10] sm:$0xf]
    %v723 = vld [vmem:[#allocation10 + $0x14] sm:$0xf]
    %v724 = vld [vmem:[#allocation10 + $0x18] sm:$0xf]
    %v725 = vld [vmem:[#allocation10 + $0x1c] sm:$0xf]
    %v726 = vld [vmem:[#allocation10 + $0x20] sm:$0xf]
    %v727 = vld [vmem:[#allocation10 + $0x24] sm:$0xf]
    %v728 = vld [vmem:[#allocation10 + $0x28] sm:$0xf]
    %v729 = vld [vmem:[#allocation10 + $0x2c] sm:$0xf]
    %v730 = vld [vmem:[#allocation10 + $0x30] sm:$0xf]
    %v731 = vld [vmem:[#allocation10 + $0x34] sm:$0xf]
    %v732 = vld [vmem:[#allocation10 + $0x38] sm:$0xf]
    %v733 = vld [vmem:[#allocation10 + $0x3c] sm:$0xf]
    %v734 = vld [vmem:[%s12] sm:$0x1]
    %v736 = vlaneseq
    %v737 = vshrl.u32 %v736, 7
    %v738 = vsub.s32 0, %v737
    %v739 = vrot.slane %v734, %v738
    %v757 = vunpack.c.l.b16 %v718
    %v758 = vunpack.c.l.b16 %v719
    %v759 = vunpack.c.l.b16 %v720
    %v760 = vunpack.c.l.b16 %v721
    %v761 = vunpack.c.l.b16 %v722
    %v762 = vunpack.c.l.b16 %v723
    %v763 = vunpack.c.l.b16 %v724
    %v764 = vunpack.c.l.b16 %v725
    %v765 = vunpack.c.l.b16 %v726
    %v766 = vunpack.c.l.b16 %v727
    %v767 = vunpack.c.l.b16 %v728
    %v768 = vunpack.c.l.b16 %v729
    %v769 = vunpack.c.l.b16 %v730
    %v770 = vunpack.c.l.b16 %v731
    %v771 = vunpack.c.l.b16 %v732
    %v772 = vunpack.c.l.b16 %v733
    %v773 = vpack.c.b16 %v758, %v757
    %v774 = vpack.c.b16 %v760, %v759
    %v775 = vpack.c.b16 %v762, %v761
    %v776 = vpack.c.b16 %v764, %v763
    %v777 = vpack.c.b16 %v766, %v765
    %v778 = vpack.c.b16 %v768, %v767
    %v779 = vpack.c.b16 %v770, %v769
    %v780 = vpack.c.b16 %v772, %v771
    %789 = vmatprep.subr.bf16.mxu0 0
    %790 = vmatpush1.bf16.msra.mxu0 %v773
    %791 = vmatprep.subr.bf16.mxu0 0
    %792 = vmatpush1.bf16.msra.mxu0 %v774
    %793 = vmatprep.subr.bf16.mxu0 0
    %794 = vmatpush1.bf16.msra.mxu0 %v775
    %795 = vmatprep.subr.bf16.mxu0 0
    %796 = vmatpush1.bf16.msra.mxu0 %v776
    %797 = vmatprep.subr.bf16.mxu0 0
    %798 = vmatpush1.bf16.msra.mxu0 %v777
    %799 = vmatprep.subr.bf16.mxu0 0
    %800 = vmatpush1.bf16.msra.mxu0 %v778
    %801 = vmatprep.subr.bf16.mxu0 0
    %802 = vmatpush1.bf16.msra.mxu0 %v779
    %803 = vmatprep.subr.bf16.mxu0 0
    %804 = vmatpush1.bf16.msra.mxu0 %v780
    %805 = vmatprep.subr.bf16.mxu0 0
    %806 = vmatpush1.bf16.msra.mxu0 0
    %807 = vmatprep.subr.bf16.mxu0 0
    %808 = vmatpush1.bf16.msra.mxu0 0
    %809 = vmatprep.subr.bf16.mxu0 0
    %810 = vmatpush1.bf16.msra.mxu0 0
    %811 = vmatprep.subr.bf16.mxu0 0
    %812 = vmatpush1.bf16.msra.mxu0 0
    %813 = vmatprep.subr.bf16.mxu0 0
    %814 = vmatpush1.bf16.msra.mxu0 0
    %815 = vmatprep.subr.bf16.mxu0 0
    %816 = vmatpush1.bf16.msra.mxu0 0
    %817 = vmatprep.subr.bf16.mxu0 0
    %818 = vmatpush1.bf16.msra.mxu0 0
    %819 = vmatprep.subr.bf16.mxu0 0
    %820 = vmatpush1.bf16.msra.mxu0 0
    %821 = vmatprep.mubr.bf16.mxu0 0
    %822 = vmatmul.mubr.bf16.gmra.mrb[0].mxu0 %v717
    %v823 = vpop.f32.mrb[0].mxu0
    %v824 = vadd.f32 %v739, %v823
    %v825 = vpop.f32.mrb[0].mxu0
    %v826 = vpop.f32.mrb[0].mxu0
    %v827 = vadd.f32 %v739, %v826
    %v828 = vpop.f32.mrb[0].mxu0
    %829 = vdwg.mxu0
    %830 = vst [vmem:[#allocation11] sm:$0xff] %v824
    %831 = vst [vmem:[#allocation11 + $0x8] sm:$0xff] %v827
    // Predicated region
    $region74: #{tpu_custom_call.1} parent=1 // pred_check
      _
    $region75: #{tpu_custom_call.1} parent=1 // pred_check_branch
      %833 = sbr.rel (0) target = $region77
    $region76: #{tpu_custom_call.1} parent=1 // pred_region
      %s835 = ssub.s32 256, 256
      %836 = vsyncadd [#allocation4], %s835
      %s837 = sshll.u32 [#allocation11], 4
      %s838 = int_to_ptr.vmem [resolvable:$true] %s837
      %843 = dma.vmem_to_hbm [thread:$0]  %s838, 256, %s13, [#allocation4], 128, 128, 8
    $region77: #{tpu_custom_call.1} parent=1 // pred_fallthru
      _
    // Predicated region
    $region78: #{tpu_custom_call.1} parent=1 // pred_check
      _
    $region79: #{tpu_custom_call.1} parent=1 // pred_check_branch
      %845 = sbr.rel (0) target = $region81
    $region80: #{tpu_custom_call.1} parent=1 // pred_region
      %846 = dma.done [#allocation4], 256
    $region81: #{tpu_custom_call.1} parent=1 // pred_fallthru
      _
    %847 = vsyncpa [#allocation3], 1
    %848 = vsyncpa [#allocation6], 1
    %849 = vsyncpa [#allocation9], 1
    %850 = vsyncpa [#allocation4], 1

</llo_original>
